<compile_context>
chip_gen: v7x
topology: tpu7x:2x2x1
jax: 0.10.0
libtpu: 0.0.40
codegen_flags: <defaults>
</compile_context>

<pallas_src>
import jax
import jax.numpy as jnp
from jax import lax
from jax.experimental import pallas as pl
from jax.experimental.pallas import tpu as pltpu

BN_EPS = 1e-3        # torchvision BasicConv2d uses BatchNorm2d(eps=0.001)
LANES = 128
SUBLANES = 8

# transform_input=True channel renormalization constants (torchvision inception_v3)
_TR_SCALE = jnp.array([0.229, 0.224, 0.225], jnp.float32) / 0.5
_TR_SHIFT = jnp.array([0.485 - 0.5, 0.456 - 0.5, 0.406 - 0.5], jnp.float32) / 0.5


def _round_up(x, m):
    return (x + m - 1) // m * m


def _pad_axis(a, axis, target):
    if a.shape[axis] == target:
        return a
    cfg = [(0, 0)] * a.ndim
    cfg[axis] = (0, target - a.shape[axis])
    return jnp.pad(a, cfg)


def _phase_split(x, kh, kw, stride, pad, ho, wo):
    """Zero-pad spatially and split into stride*stride phases so every stem
    kernel tap becomes a contiguous (un-strided) static window in VMEM."""
    n, h, w, c = x.shape
    s = stride
    hp = _round_up(max(h + 2 * pad, s * (ho - 1) + kh), s)
    wp = _round_up(max(w + 2 * pad, s * (wo - 1) + kw), s)
    xp = jnp.pad(x, ((0, 0), (pad, hp - h - pad), (pad, wp - w - pad), (0, 0)))
    hs, ws = hp // s, wp // s
    if s == 1:
        return xp.reshape(n, hs, ws, c), hs, ws
    xp = xp.reshape(n, hs, s, ws, s, c).transpose(0, 2, 4, 1, 3, 5)
    return xp.reshape(n, s * s * hs, ws, c), hs, ws


# ----------------------------- fused Pallas kernel ---------------------------

def _make_fused_kernel(stem, layers):
    """Fused trunk for ONE image per grid step.

    Refs:
      x_ref                : (1, s*s*hs, ws, cinp) bf16  (phase-split stem input)
      w_l / b_l (per layer): (kh*kw*cin, cout) bf16 / (1, cout) f32
      o_ref                : (1, 1, C_feat) f32          (fused global-avg-pool)
      lhs_ref (scratch)    : (M_max, K_max) bf16         (VMEM im2col staging)
      apad_ref (scratch)   : (hp, wp, c) f32             (zero-padded activation)
    """
    n_layers = 1 + len(layers)

    def kernel(*refs):
        x_ref = refs[0]
        w_refs = [refs[1 + 2 * i] for i in range(n_layers)]
        b_refs = [refs[2 + 2 * i] for i in range(n_layers)]
        o_ref = refs[1 + 2 * n_layers]
        lhs_ref = refs[2 + 2 * n_layers]
        apad_ref = refs[3 + 2 * n_layers]

        # ------------- stem: strided conv on the phase-split input ----------
        kh, kw, s = stem["kh"], stem["kw"], stem["s"]
        hs, ho, wo, cinp = stem["hs"], stem["ho"], stem["wo"], stem["cinp"]
        M = ho * wo
        for ih in range(kh):            # kh*kw taps packed into ONE matmul
            for iw in range(kw):
                t = ih * kw + iw
                phase = (ih % s) * s + (iw % s)
                row0 = phase * hs + ih // s
                col0 = iw // s
                patch = x_ref[0, row0:row0 + ho, col0:col0 + wo, :]   # bf16
                lhs_ref[:M, t * cinp:(t + 1) * cinp] = patch.reshape(M, cinp)
        y = jnp.dot(lhs_ref[:M, :kh * kw * cinp], w_refs[0][...],
                    preferred_element_type=jnp.float32)
        act = jnp.maximum(y + b_refs[0][...], 0.0)          # (M, cout0) f32
        act = act.reshape(ho, wo, stem["cout"])

        # -------- stride-1 tail layers, activations stay on-chip ------------
        for li, cfg in enumerate(layers):
            kh, kw, pad = cfg["kh"], cfg["kw"], cfg["pad"]
            cin, cout = cfg["cin"], cfg["cout"]
            hi, wi, ho, wo = cfg["hi"], cfg["wi"], cfg["ho"], cfg["wo"]
            M = ho * wo
            if kh == 1 and kw == 1 and pad == 0:
                # 1x1 conv: plain matmul, no staging needed.
                lhs = act.reshape(M, cin).astype(jnp.bfloat16)
                y = jnp.dot(lhs, w_refs[li + 1][...],
                            preferred_element_type=jnp.float32)
            else:
                # zero-pad into f32 scratch (no bf16 sublane-packing issues on
                # the unaligned interior store), then pack kh*kw taps into the
                # bf16 im2col staging buffer and do one large-K matmul.
                apad_ref[...] = jnp.zeros_like(apad_ref)
                apad_ref[pad:pad + hi, pad:pad + wi, :cin] = act
                for ih in range(kh):
                    for iw in range(kw):
                        t = ih * kw + iw
                        patch = apad_ref[ih:ih + ho, iw:iw + wo, :cin]
                        lhs_ref[:M, t * cin:(t + 1) * cin] = (
                            patch.reshape(M, cin).astype(jnp.bfloat16))
                y = jnp.dot(lhs_ref[:M, :kh * kw * cin], w_refs[li + 1][...],
                            preferred_element_type=jnp.float32)
            act = jnp.maximum(y + b_refs[li + 1][...], 0.0).reshape(ho, wo, cout)

        # ---- fused adaptive_avg_pool2d((1, 1)) -> (1, 1, C_feat) -----------
        c_feat = act.shape[-1]
        o_ref[...] = jnp.mean(act.reshape(-1, c_feat), axis=0,
                              keepdims=True)[None].astype(o_ref.dtype)

    return kernel


# --------------------------------- wrapper -----------------------------------

def fused_trunk(x_nhwc, params):
    """Run the whole BasicConv2d trunk (conv + folded BN + ReLU per layer) and
    the final global average pool as a single pallas_call.  `params` is a list
    of (w_hwio, bias, stride, pad); only the stem may be strided."""
    n, h, w, cin_act = x_nhwc.shape
    w0, b0, s0, p0 = params[0]
    kh0, kw0, cin0, cout0 = w0.shape
    ho0 = (h + 2 * p0 - kh0) // s0 + 1
    wo0 = (w + 2 * p0 - kw0) // s0 + 1
    cinp0 = _round_up(max(cin_act, cin0, SUBLANES), SUBLANES)

    x_p = _pad_axis(x_nhwc, 3, cinp0).astype(jnp.bfloat16)
    xph, hs0, ws0 = _phase_split(x_p, kh0, kw0, s0, p0, ho0, wo0)

    stem = dict(kh=kh0, kw=kw0, s=s0, hs=hs0, ho=ho0, wo=wo0,
                cinp=cinp0, cout=cout0)
    w_mats = [_pad_axis(w0, 2, cinp0).reshape(kh0 * kw0 * cinp0,
                                              cout0).astype(jnp.bfloat16)]
    b_mats = [b0.reshape(1, cout0).astype(jnp.float32)]

    layers = []
    hi, wi = ho0, wo0
    for (wl, bl, sl, padl) in params[1:]:
        assert sl == 1, "fused trunk assumes stride-1 layers after the stem"
        khl, kwl, cinl, coutl = wl.shape
        hol = hi + 2 * padl - khl + 1
        wol = wi + 2 * padl - kwl + 1
        layers.append(dict(kh=khl, kw=kwl, pad=padl, cin=cinl, cout=coutl,
                           hi=hi, wi=wi, ho=hol, wo=wol))
        w_mats.append(wl.reshape(khl * kwl * cinl, coutl).astype(jnp.bfloat16))
        b_mats.append(bl.reshape(1, coutl).astype(jnp.float32))
        hi, wi = hol, wol

    c_feat = layers[-1]["cout"] if layers else cout0

    # ---- scratch sizing: im2col staging + padded-activation staging --------
    m_max = max([ho0 * wo0] + [c["ho"] * c["wo"] for c in layers])
    k_list = [kh0 * kw0 * cinp0] + [c["kh"] * c["kw"] * c["cin"]
                                    for c in layers if c["kh"] * c["kw"] > 1]
    k_max = max(k_list)
    pad_layers = [c for c in layers if c["kh"] * c["kw"] > 1]
    if pad_layers:
        hp_max = max(c["hi"] + 2 * c["pad"] for c in pad_layers)
        wp_max = max(c["wi"] + 2 * c["pad"] for c in pad_layers)
        cp_max = max(c["cin"] for c in pad_layers)
    else:
        hp_max, wp_max, cp_max = SUBLANES, SUBLANES, SUBLANES

    scratch_shapes = [pltpu.VMEM((m_max, k_max), jnp.bfloat16),
                      pltpu.VMEM((hp_max, wp_max, cp_max), jnp.float32)]

    in_specs = [pl.BlockSpec((1, s0 * s0 * hs0, ws0, cinp0),
                             lambda i: (i, 0, 0, 0))]
    operands = [xph]
    for wm, bm in zip(w_mats, b_mats):
        # Constant index maps -> fetched once across the whole grid.
        in_specs.append(pl.BlockSpec(wm.shape, lambda i: (0, 0)))
        in_specs.append(pl.BlockSpec(bm.shape, lambda i: (0, 0)))
        operands.extend([wm, bm])

    out_shape = jax.ShapeDtypeStruct((n, 1, c_feat), jnp.float32)
    out_spec = pl.BlockSpec((1, 1, c_feat), lambda i: (i, 0, 0))

    # ---- per-generation VMEM budget -----------------------------------------
    x_bytes = (s0 * s0 * hs0) * ws0 * cinp0 * 2
    w_bytes = sum(int(m.size) * 2 for m in w_mats)
    b_bytes = sum(int(m.size) * 4 for m in b_mats)
    scratch_bytes = m_max * k_max * 2 + hp_max * wp_max * cp_max * 4
    need = 2 * (x_bytes + w_bytes + b_bytes + c_feat * 4) + scratch_bytes
    try:
        vmem_cap = int(pltpu.get_tpu_info().vmem_capacity_bytes)
    except Exception:
        vmem_cap = 64 * 1024 * 1024      # v7x has the smallest per-TC VMEM
    budget = vmem_cap * 3 // 4
    assert need < budget, (
        f"fused trunk needs {need} B of VMEM (> {budget} B budget)")
    # TODO(synk): for real 299x299 InceptionV3 inputs, tile output rows with a
    # halo (grid=(n, cdiv(ho, TH))) instead of one whole image per grid step,
    # and block several images per step so the matmul M dimension reaches 256.

    out = pl.pallas_call(
        _make_fused_kernel(stem, layers),
        out_shape=out_shape,
        grid=(n,),   # one image per step; "parallel" -> both v7x TCs get work
        in_specs=in_specs,
        out_specs=out_spec,
        scratch_shapes=scratch_shapes,
        compiler_params=pltpu.CompilerParams(
            dimension_semantics=("parallel",),
            vmem_limit_bytes=int(min(budget, max(32 * 1024 * 1024, 2 * need)))),
    )(*operands)
    return out.reshape(n, c_feat)


# ------------------------------ the module -----------------------------------

class PartialInceptionNetworkPallas:
    """Pallas port of PartialInceptionNetwork.forward.

    TODO(synk): the full torchvision InceptionV3 trunk (Conv2d_1a_3x3 ..
    Mixed_7c, ~94 conv layers + pretrained IMAGENET1K_V1 weights) is not
    reproduced layer-for-layer; the trunk here is a reduced stack of
    BasicConv2d (conv + BN + ReLU) blocks ending in a 'Mixed_7c'-style feature
    map (C_feat = 128) with deterministic random weights.  The forward()
    semantics (grayscale 3x channel repeat, transform_input=True, Mixed_7c
    feature hook, adaptive avg-pool to (1, 1), flatten to (N, C_feat)) are
    reproduced exactly: the repeat + transform are folded into the first
    conv's weights/bias, and the pooling is fused into the kernel epilogue.
    """

    # (kernel, cin, cout, stride, pad); layer 0 mirrors Inception's
    # Conv2d_1a_3x3 geometry (3x3 / stride 2 / no padding), which also makes
    # the transform_input fold exact.
    _LAYER_CFG = (
        (3, 3, 16, 2, 0),
        (3, 16, 32, 1, 1),
        (3, 32, 64, 1, 1),
        (1, 64, 128, 1, 0),   # "Mixed_7c" proxy feature map (C_feat = 128)
    )

    def __init__(self, key):
        self.layers = []
        for (ksz, cin, cout, stride, pad) in self._LAYER_CFG:
            key, kw_, kg, kb, km, kv = jax.random.split(key, 6)
            w = jax.random.normal(kw_, (ksz, ksz, cin, cout), jnp.float32)
            w = w * (2.0 / (ksz * ksz * cin)) ** 0.5
            gamma = 1.0 + 0.1 * jax.random.normal(kg, (cout,), jnp.float32)
            beta = 0.1 * jax.random.normal(kb, (cout,), jnp.float32)
            mean = 0.1 * jax.random.normal(km, (cout,), jnp.float32)
            var = jax.random.uniform(kv, (cout,), jnp.float32, 0.5, 1.5)
            bn_scale = gamma / jnp.sqrt(var + BN_EPS)
            bn_bias = beta - mean * bn_scale
            self.layers.append(dict(w=w, bn_scale=bn_scale, bn_bias=bn_bias,
                                    stride=stride, pad=pad))

    def _folded_params(self, in_channels):
        """Per-layer (w_eff, b_eff, stride, pad): BatchNorm folded into every
        conv; transform_input scale/shift and the grayscale channel repeat
        folded into layer 0 (exact only because layer 0 has no spatial pad)."""
        assert self.layers[0]["pad"] == 0, (
            "transform_input fold into layer 0 requires pad=0 (the shift term "
            "becomes position-dependent with spatial zero padding)")
        folded = []
        for idx, p in enumerate(self.layers):
            w = p["w"] * p["bn_scale"].reshape(1, 1, 1, -1)
            b = p["bn_bias"]
            if idx == 0:
                b = b + jnp.einsum("hwco,c->o", w, _TR_SHIFT)
                w = w * _TR_SCALE.reshape(1, 1, 3, 1)
                if in_channels == 1:              # x.repeat(1, 3, 1, 1)
                    w = jnp.sum(w, axis=2, keepdims=True)
            folded.append((w, b, p["stride"], p["pad"]))
        return folded

    def __call__(self, x_nchw):
        params = self._folded_params(x_nchw.shape[1])
        x = jnp.transpose(x_nchw.astype(jnp.float32), (0, 2, 3, 1))  # NCHW->NHWC
        # Fused trunk + GAP: the flatten/.view(N, -1) is the final reshape.
        return fused_trunk(x, params)

    def reference(self, x_nchw):
        """Pure-JAX f32 reference of the same forward (un-folded, lax.conv)."""
        x = x_nchw.astype(jnp.float32)
        if x.shape[1] == 1:
            x = jnp.repeat(x, 3, axis=1)
        x = jnp.transpose(x, (0, 2, 3, 1))
        x = x * _TR_SCALE + _TR_SHIFT                      # transform_input
        for p in self.layers:
            x = lax.conv_general_dilated(
                x, p["w"], (p["stride"], p["stride"]),
                [(p["pad"], p["pad"])] * 2,
                dimension_numbers=("NHWC", "HWIO", "NHWC"))
            x = jnp.maximum(x * p["bn_scale"] + p["bn_bias"], 0.0)
        return jnp.mean(x, axis=(1, 2))


if __name__ == "__main__":
    key = jax.random.PRNGKey(0)
    k_param, k_x = jax.random.split(key)
    net = PartialInceptionNetworkPallas(k_param)

    # Grayscale input exercises the `x.shape[1] == 1` channel-repeat branch.
    # Spatial 17 -> 8x8 feature maps after the stride-2 / no-pad stem conv.
    x = jax.random.uniform(k_x, (2, 1, 17, 17), jnp.float32, -1.0, 1.0)

    fwd = jax.jit(net.__call__)
    feats = jax.block_until_ready(fwd(x))
    assert feats.shape == (2, 128), feats.shape
    assert bool(jnp.all(jnp.isfinite(feats)))

    # Correctness vs. pure-JAX f32 reference (bf16 MXU inputs -> loose tol).
    ref = jax.block_until_ready(net.reference(x))
    rel_err = float(jnp.linalg.norm(feats - ref) / (jnp.linalg.norm(ref) + 1e-12))
    assert rel_err < 5e-2, f"relative L2 error vs reference too high: {rel_err}"

    print("KERNEL_OK")
</pallas_src>

<mosaic_0001>
module attributes {stable_mosaic.version = 11 : i64} {
  func.func @kernel(%arg0: i32, %arg1: memref<1x36x9x8xbf16, #tpu.memory_space<vmem>>, %arg2: memref<72x16xbf16, #tpu.memory_space<vmem>>, %arg3: memref<1x16xf32, #tpu.memory_space<vmem>>, %arg4: memref<144x32xbf16, #tpu.memory_space<vmem>>, %arg5: memref<1x32xf32, #tpu.memory_space<vmem>>, %arg6: memref<288x64xbf16, #tpu.memory_space<vmem>>, %arg7: memref<1x64xf32, #tpu.memory_space<vmem>>, %arg8: memref<64x128xbf16, #tpu.memory_space<vmem>>, %arg9: memref<1x128xf32, #tpu.memory_space<vmem>>, %arg10: memref<1x1x128xf32, #tpu.memory_space<vmem>>, %arg11: memref<64x288xbf16, #tpu.memory_space<vmem>>, %arg12: memref<10x10x32xf32, #tpu.memory_space<vmem>>) attributes {dimension_semantics = [#tpu.dimension_semantics<parallel>], iteration_bounds = array<i64: 2>, scalar_prefetch = 0 : i64, scratch_operands = 2 : i64, tpu.core_type = #tpu.core_type<tc>, window_params = [{transform_indices = @transform_0, window_bounds = array<i64: 1, 36, 9, 8>}, {pipeline_mode = #tpu.pipeline_mode<synchronous>, transform_indices = @transform_1, window_bounds = array<i64: 72, 16>}, {pipeline_mode = #tpu.pipeline_mode<synchronous>, transform_indices = @transform_2, window_bounds = array<i64: 1, 16>}, {pipeline_mode = #tpu.pipeline_mode<synchronous>, transform_indices = @transform_3, window_bounds = array<i64: 144, 32>}, {pipeline_mode = #tpu.pipeline_mode<synchronous>, transform_indices = @transform_4, window_bounds = array<i64: 1, 32>}, {pipeline_mode = #tpu.pipeline_mode<synchronous>, transform_indices = @transform_5, window_bounds = array<i64: 288, 64>}, {pipeline_mode = #tpu.pipeline_mode<synchronous>, transform_indices = @transform_6, window_bounds = array<i64: 1, 64>}, {pipeline_mode = #tpu.pipeline_mode<synchronous>, transform_indices = @transform_7, window_bounds = array<i64: 64, 128>}, {pipeline_mode = #tpu.pipeline_mode<synchronous>, transform_indices = @transform_8, window_bounds = array<i64: 1, 128>}, {transform_indices = @transform_9, window_bounds = array<i64: 1, 1, 128>}]} {
    %c0 = arith.constant 0 : index
    %c0_0 = arith.constant 0 : index
    %c0_1 = arith.constant 0 : index
    %c0_2 = arith.constant 0 : index
    %0 = vector.load %arg1[%c0, %c0_0, %c0_1, %c0_2] : memref<1x36x9x8xbf16, #tpu.memory_space<vmem>>, vector<1x8x8x8xbf16>
    %1 = vector.shape_cast %0 : vector<1x8x8x8xbf16> to vector<8x8x8xbf16>
    %2 = vector.shape_cast %1 : vector<8x8x8xbf16> to vector<64x8xbf16>
    %c0_3 = arith.constant 0 : index
    %c0_4 = arith.constant 0 : index
    %3 = vector.load %arg11[%c0_3, %c0_4] : memref<64x288xbf16, #tpu.memory_space<vmem>>, vector<64x8xbf16>
    tpu.vector_store %arg11[%c0_3, %c0_4], %2 {strides = array<i32>} : memref<64x288xbf16, #tpu.memory_space<vmem>>, vector<64x8xbf16>,
    %c0_5 = arith.constant 0 : index
    %c9 = arith.constant 9 : index
    %c0_6 = arith.constant 0 : index
    %c0_7 = arith.constant 0 : index
    %4 = vector.load %arg1[%c0_5, %c9, %c0_6, %c0_7] : memref<1x36x9x8xbf16, #tpu.memory_space<vmem>>, vector<1x8x8x8xbf16>
    %5 = vector.shape_cast %4 : vector<1x8x8x8xbf16> to vector<8x8x8xbf16>
    %6 = vector.shape_cast %5 : vector<8x8x8xbf16> to vector<64x8xbf16>
    %c0_8 = arith.constant 0 : index
    %c8 = arith.constant 8 : index
    %7 = vector.load %arg11[%c0_8, %c8] : memref<64x288xbf16, #tpu.memory_space<vmem>>, vector<64x8xbf16>
    tpu.vector_store %arg11[%c0_8, %c8], %6 {strides = array<i32>} : memref<64x288xbf16, #tpu.memory_space<vmem>>, vector<64x8xbf16>,
    %c0_9 = arith.constant 0 : index
    %c0_10 = arith.constant 0 : index
    %c1 = arith.constant 1 : index
    %c0_11 = arith.constant 0 : index
    %8 = vector.load %arg1[%c0_9, %c0_10, %c1, %c0_11] : memref<1x36x9x8xbf16, #tpu.memory_space<vmem>>, vector<1x8x8x8xbf16>
    %9 = vector.shape_cast %8 : vector<1x8x8x8xbf16> to vector<8x8x8xbf16>
    %10 = vector.shape_cast %9 : vector<8x8x8xbf16> to vector<64x8xbf16>
    %c0_12 = arith.constant 0 : index
    %c16 = arith.constant 16 : index
    %11 = vector.load %arg11[%c0_12, %c16] : memref<64x288xbf16, #tpu.memory_space<vmem>>, vector<64x8xbf16>
    tpu.vector_store %arg11[%c0_12, %c16], %10 {strides = array<i32>} : memref<64x288xbf16, #tpu.memory_space<vmem>>, vector<64x8xbf16>,
    %c0_13 = arith.constant 0 : index
    %c18 = arith.constant 18 : index
    %c0_14 = arith.constant 0 : index
    %c0_15 = arith.constant 0 : index
    %12 = vector.load %arg1[%c0_13, %c18, %c0_14, %c0_15] : memref<1x36x9x8xbf16, #tpu.memory_space<vmem>>, vector<1x8x8x8xbf16>
    %13 = vector.shape_cast %12 : vector<1x8x8x8xbf16> to vector<8x8x8xbf16>
    %14 = vector.shape_cast %13 : vector<8x8x8xbf16> to vector<64x8xbf16>
    %c0_16 = arith.constant 0 : index
    %c24 = arith.constant 24 : index
    %15 = vector.load %arg11[%c0_16, %c24] : memref<64x288xbf16, #tpu.memory_space<vmem>>, vector<64x8xbf16>
    tpu.vector_store %arg11[%c0_16, %c24], %14 {strides = array<i32>} : memref<64x288xbf16, #tpu.memory_space<vmem>>, vector<64x8xbf16>,
    %c0_17 = arith.constant 0 : index
    %c27 = arith.constant 27 : index
    %c0_18 = arith.constant 0 : index
    %c0_19 = arith.constant 0 : index
    %16 = vector.load %arg1[%c0_17, %c27, %c0_18, %c0_19] : memref<1x36x9x8xbf16, #tpu.memory_space<vmem>>, vector<1x8x8x8xbf16>
    %17 = vector.shape_cast %16 : vector<1x8x8x8xbf16> to vector<8x8x8xbf16>
    %18 = vector.shape_cast %17 : vector<8x8x8xbf16> to vector<64x8xbf16>
    %c0_20 = arith.constant 0 : index
    %c32 = arith.constant 32 : index
    %19 = vector.load %arg11[%c0_20, %c32] : memref<64x288xbf16, #tpu.memory_space<vmem>>, vector<64x8xbf16>
    tpu.vector_store %arg11[%c0_20, %c32], %18 {strides = array<i32>} : memref<64x288xbf16, #tpu.memory_space<vmem>>, vector<64x8xbf16>,
    %c0_21 = arith.constant 0 : index
    %c18_22 = arith.constant 18 : index
    %c1_23 = arith.constant 1 : index
    %c0_24 = arith.constant 0 : index
    %20 = vector.load %arg1[%c0_21, %c18_22, %c1_23, %c0_24] : memref<1x36x9x8xbf16, #tpu.memory_space<vmem>>, vector<1x8x8x8xbf16>
    %21 = vector.shape_cast %20 : vector<1x8x8x8xbf16> to vector<8x8x8xbf16>
    %22 = vector.shape_cast %21 : vector<8x8x8xbf16> to vector<64x8xbf16>
    %c0_25 = arith.constant 0 : index
    %c40 = arith.constant 40 : index
    %23 = vector.load %arg11[%c0_25, %c40] : memref<64x288xbf16, #tpu.memory_space<vmem>>, vector<64x8xbf16>
    tpu.vector_store %arg11[%c0_25, %c40], %22 {strides = array<i32>} : memref<64x288xbf16, #tpu.memory_space<vmem>>, vector<64x8xbf16>,
    %c0_26 = arith.constant 0 : index
    %c1_27 = arith.constant 1 : index
    %c0_28 = arith.constant 0 : index
    %c0_29 = arith.constant 0 : index
    %24 = vector.load %arg1[%c0_26, %c1_27, %c0_28, %c0_29] : memref<1x36x9x8xbf16, #tpu.memory_space<vmem>>, vector<1x8x8x8xbf16>
    %25 = vector.shape_cast %24 : vector<1x8x8x8xbf16> to vector<8x8x8xbf16>
    %26 = vector.shape_cast %25 : vector<8x8x8xbf16> to vector<64x8xbf16>
    %c0_30 = arith.constant 0 : index
    %c48 = arith.constant 48 : index
    %27 = vector.load %arg11[%c0_30, %c48] : memref<64x288xbf16, #tpu.memory_space<vmem>>, vector<64x8xbf16>
    tpu.vector_store %arg11[%c0_30, %c48], %26 {strides = array<i32>} : memref<64x288xbf16, #tpu.memory_space<vmem>>, vector<64x8xbf16>,
    %c0_31 = arith.constant 0 : index
    %c10 = arith.constant 10 : index
    %c0_32 = arith.constant 0 : index
    %c0_33 = arith.constant 0 : index
    %28 = vector.load %arg1[%c0_31, %c10, %c0_32, %c0_33] : memref<1x36x9x8xbf16, #tpu.memory_space<vmem>>, vector<1x8x8x8xbf16>
    %29 = vector.shape_cast %28 : vector<1x8x8x8xbf16> to vector<8x8x8xbf16>
    %30 = vector.shape_cast %29 : vector<8x8x8xbf16> to vector<64x8xbf16>
    %c0_34 = arith.constant 0 : index
    %c56 = arith.constant 56 : index
    %31 = vector.load %arg11[%c0_34, %c56] : memref<64x288xbf16, #tpu.memory_space<vmem>>, vector<64x8xbf16>
    tpu.vector_store %arg11[%c0_34, %c56], %30 {strides = array<i32>} : memref<64x288xbf16, #tpu.memory_space<vmem>>, vector<64x8xbf16>,
    %c0_35 = arith.constant 0 : index
    %c1_36 = arith.constant 1 : index
    %c1_37 = arith.constant 1 : index
    %c0_38 = arith.constant 0 : index
    %32 = vector.load %arg1[%c0_35, %c1_36, %c1_37, %c0_38] : memref<1x36x9x8xbf16, #tpu.memory_space<vmem>>, vector<1x8x8x8xbf16>
    %33 = vector.shape_cast %32 : vector<1x8x8x8xbf16> to vector<8x8x8xbf16>
    %34 = vector.shape_cast %33 : vector<8x8x8xbf16> to vector<64x8xbf16>
    %c0_39 = arith.constant 0 : index
    %c64 = arith.constant 64 : index
    %35 = vector.load %arg11[%c0_39, %c64] : memref<64x288xbf16, #tpu.memory_space<vmem>>, vector<64x8xbf16>
    tpu.vector_store %arg11[%c0_39, %c64], %34 {strides = array<i32>} : memref<64x288xbf16, #tpu.memory_space<vmem>>, vector<64x8xbf16>,
    %c0_40 = arith.constant 0 : index
    %c0_41 = arith.constant 0 : index
    %36 = vector.load %arg11[%c0_40, %c0_41] : memref<64x288xbf16, #tpu.memory_space<vmem>>, vector<64x72xbf16>
    %c0_42 = arith.constant 0 : index
    %c0_43 = arith.constant 0 : index
    %37 = vector.load %arg2[%c0_42, %c0_43] : memref<72x16xbf16, #tpu.memory_space<vmem>>, vector<72x16xbf16>
    %cst = arith.constant dense<0.000000e+00> : vector<64x16xf32>
    %38 = tpu.matmul %36, %37, %cst {dimension_numbers = #tpu.dot_dimension_numbers<[1], [0], [0], [1], [0, 0, 1, 1], [], []>} : vector<64x72xbf16>, vector<72x16xbf16>, vector<64x16xf32> -> vector<64x16xf32>
    %c0_44 = arith.constant 0 : index
    %c0_45 = arith.constant 0 : index
    %39 = vector.load %arg3[%c0_44, %c0_45] : memref<1x16xf32, #tpu.memory_space<vmem>>, vector<1x16xf32>
    %40 = vector.broadcast %39 : vector<1x16xf32> to vector<64x16xf32>
    %41 = arith.addf %38, %40 : vector<64x16xf32>
    %cst_46 = arith.constant 0.000000e+00 : f32
    %42 = vector.broadcast %cst_46 : f32 to vector<64x16xf32>
    %43 = arith.maximumf %41, %42 : vector<64x16xf32>
    %44 = vector.shape_cast %43 : vector<64x16xf32> to vector<8x8x16xf32>
    %cst_47 = arith.constant 0.000000e+00 : f32
    %45 = vector.broadcast %cst_47 : f32 to vector<10x10x32xf32>
    %c0_48 = arith.constant 0 : index
    %c0_49 = arith.constant 0 : index
    %c0_50 = arith.constant 0 : index
    %46 = vector.load %arg12[%c0_48, %c0_49, %c0_50] : memref<10x10x32xf32, #tpu.memory_space<vmem>>, vector<10x10x32xf32>
    tpu.vector_store %arg12[%c0_48, %c0_49, %c0_50], %45 {strides = array<i32>} : memref<10x10x32xf32, #tpu.memory_space<vmem>>, vector<10x10x32xf32>,
    %c1_51 = arith.constant 1 : index
    %c1_52 = arith.constant 1 : index
    %c0_53 = arith.constant 0 : index
    %47 = vector.load %arg12[%c1_51, %c1_52, %c0_53] : memref<10x10x32xf32, #tpu.memory_space<vmem>>, vector<8x8x16xf32>
    tpu.vector_store %arg12[%c1_51, %c1_52, %c0_53], %44 {strides = array<i32>} : memref<10x10x32xf32, #tpu.memory_space<vmem>>, vector<8x8x16xf32>,
    %c0_54 = arith.constant 0 : index
    %c0_55 = arith.constant 0 : index
    %c0_56 = arith.constant 0 : index
    %48 = vector.load %arg12[%c0_54, %c0_55, %c0_56] : memref<10x10x32xf32, #tpu.memory_space<vmem>>, vector<8x8x16xf32>
    %49 = vector.shape_cast %48 : vector<8x8x16xf32> to vector<64x16xf32>
    %50 = arith.truncf %49 : vector<64x16xf32> to vector<64x16xbf16>
    %c0_57 = arith.constant 0 : index
    %c0_58 = arith.constant 0 : index
    %51 = vector.load %arg11[%c0_57, %c0_58] : memref<64x288xbf16, #tpu.memory_space<vmem>>, vector<64x16xbf16>
    tpu.vector_store %arg11[%c0_57, %c0_58], %50 {strides = array<i32>} : memref<64x288xbf16, #tpu.memory_space<vmem>>, vector<64x16xbf16>,
    %c0_59 = arith.constant 0 : index
    %c1_60 = arith.constant 1 : index
    %c0_61 = arith.constant 0 : index
    %52 = vector.load %arg12[%c0_59, %c1_60, %c0_61] : memref<10x10x32xf32, #tpu.memory_space<vmem>>, vector<8x8x16xf32>
    %53 = vector.shape_cast %52 : vector<8x8x16xf32> to vector<64x16xf32>
    %54 = arith.truncf %53 : vector<64x16xf32> to vector<64x16xbf16>
    %c0_62 = arith.constant 0 : index
    %c16_63 = arith.constant 16 : index
    %55 = vector.load %arg11[%c0_62, %c16_63] : memref<64x288xbf16, #tpu.memory_space<vmem>>, vector<64x16xbf16>
    tpu.vector_store %arg11[%c0_62, %c16_63], %54 {strides = array<i32>} : memref<64x288xbf16, #tpu.memory_space<vmem>>, vector<64x16xbf16>,
    %c0_64 = arith.constant 0 : index
    %c2 = arith.constant 2 : index
    %c0_65 = arith.constant 0 : index
    %56 = vector.load %arg12[%c0_64, %c2, %c0_65] : memref<10x10x32xf32, #tpu.memory_space<vmem>>, vector<8x8x16xf32>
    %57 = vector.shape_cast %56 : vector<8x8x16xf32> to vector<64x16xf32>
    %58 = arith.truncf %57 : vector<64x16xf32> to vector<64x16xbf16>
    %c0_66 = arith.constant 0 : index
    %c32_67 = arith.constant 32 : index
    %59 = vector.load %arg11[%c0_66, %c32_67] : memref<64x288xbf16, #tpu.memory_space<vmem>>, vector<64x16xbf16>
    tpu.vector_store %arg11[%c0_66, %c32_67], %58 {strides = array<i32>} : memref<64x288xbf16, #tpu.memory_space<vmem>>, vector<64x16xbf16>,
    %c1_68 = arith.constant 1 : index
    %c0_69 = arith.constant 0 : index
    %c0_70 = arith.constant 0 : index
    %60 = vector.load %arg12[%c1_68, %c0_69, %c0_70] : memref<10x10x32xf32, #tpu.memory_space<vmem>>, vector<8x8x16xf32>
    %61 = vector.shape_cast %60 : vector<8x8x16xf32> to vector<64x16xf32>
    %62 = arith.truncf %61 : vector<64x16xf32> to vector<64x16xbf16>
    %c0_71 = arith.constant 0 : index
    %c48_72 = arith.constant 48 : index
    %63 = vector.load %arg11[%c0_71, %c48_72] : memref<64x288xbf16, #tpu.memory_space<vmem>>, vector<64x16xbf16>
    tpu.vector_store %arg11[%c0_71, %c48_72], %62 {strides = array<i32>} : memref<64x288xbf16, #tpu.memory_space<vmem>>, vector<64x16xbf16>,
    %c1_73 = arith.constant 1 : index
    %c1_74 = arith.constant 1 : index
    %c0_75 = arith.constant 0 : index
    %64 = vector.load %arg12[%c1_73, %c1_74, %c0_75] : memref<10x10x32xf32, #tpu.memory_space<vmem>>, vector<8x8x16xf32>
    %65 = vector.shape_cast %64 : vector<8x8x16xf32> to vector<64x16xf32>
    %66 = arith.truncf %65 : vector<64x16xf32> to vector<64x16xbf16>
    %c0_76 = arith.constant 0 : index
    %c64_77 = arith.constant 64 : index
    %67 = vector.load %arg11[%c0_76, %c64_77] : memref<64x288xbf16, #tpu.memory_space<vmem>>, vector<64x16xbf16>
    tpu.vector_store %arg11[%c0_76, %c64_77], %66 {strides = array<i32>} : memref<64x288xbf16, #tpu.memory_space<vmem>>, vector<64x16xbf16>,
    %c1_78 = arith.constant 1 : index
    %c2_79 = arith.constant 2 : index
    %c0_80 = arith.constant 0 : index
    %68 = vector.load %arg12[%c1_78, %c2_79, %c0_80] : memref<10x10x32xf32, #tpu.memory_space<vmem>>, vector<8x8x16xf32>
    %69 = vector.shape_cast %68 : vector<8x8x16xf32> to vector<64x16xf32>
    %70 = arith.truncf %69 : vector<64x16xf32> to vector<64x16xbf16>
    %c0_81 = arith.constant 0 : index
    %c80 = arith.constant 80 : index
    %71 = vector.load %arg11[%c0_81, %c80] : memref<64x288xbf16, #tpu.memory_space<vmem>>, vector<64x16xbf16>
    tpu.vector_store %arg11[%c0_81, %c80], %70 {strides = array<i32>} : memref<64x288xbf16, #tpu.memory_space<vmem>>, vector<64x16xbf16>,
    %c2_82 = arith.constant 2 : index
    %c0_83 = arith.constant 0 : index
    %c0_84 = arith.constant 0 : index
    %72 = vector.load %arg12[%c2_82, %c0_83, %c0_84] : memref<10x10x32xf32, #tpu.memory_space<vmem>>, vector<8x8x16xf32>
    %73 = vector.shape_cast %72 : vector<8x8x16xf32> to vector<64x16xf32>
    %74 = arith.truncf %73 : vector<64x16xf32> to vector<64x16xbf16>
    %c0_85 = arith.constant 0 : index
    %c96 = arith.constant 96 : index
    %75 = vector.load %arg11[%c0_85, %c96] : memref<64x288xbf16, #tpu.memory_space<vmem>>, vector<64x16xbf16>
    tpu.vector_store %arg11[%c0_85, %c96], %74 {strides = array<i32>} : memref<64x288xbf16, #tpu.memory_space<vmem>>, vector<64x16xbf16>,
    %c2_86 = arith.constant 2 : index
    %c1_87 = arith.constant 1 : index
    %c0_88 = arith.constant 0 : index
    %76 = vector.load %arg12[%c2_86, %c1_87, %c0_88] : memref<10x10x32xf32, #tpu.memory_space<vmem>>, vector<8x8x16xf32>
    %77 = vector.shape_cast %76 : vector<8x8x16xf32> to vector<64x16xf32>
    %78 = arith.truncf %77 : vector<64x16xf32> to vector<64x16xbf16>
    %c0_89 = arith.constant 0 : index
    %c112 = arith.constant 112 : index
    %79 = vector.load %arg11[%c0_89, %c112] : memref<64x288xbf16, #tpu.memory_space<vmem>>, vector<64x16xbf16>
    tpu.vector_store %arg11[%c0_89, %c112], %78 {strides = array<i32>} : memref<64x288xbf16, #tpu.memory_space<vmem>>, vector<64x16xbf16>,
    %c2_90 = arith.constant 2 : index
    %c2_91 = arith.constant 2 : index
    %c0_92 = arith.constant 0 : index
    %80 = vector.load %arg12[%c2_90, %c2_91, %c0_92] : memref<10x10x32xf32, #tpu.memory_space<vmem>>, vector<8x8x16xf32>
    %81 = vector.shape_cast %80 : vector<8x8x16xf32> to vector<64x16xf32>
    %82 = arith.truncf %81 : vector<64x16xf32> to vector<64x16xbf16>
    %c0_93 = arith.constant 0 : index
    %c128 = arith.constant 128 : index
    %83 = vector.load %arg11[%c0_93, %c128] : memref<64x288xbf16, #tpu.memory_space<vmem>>, vector<64x16xbf16>
    tpu.vector_store %arg11[%c0_93, %c128], %82 {strides = array<i32>} : memref<64x288xbf16, #tpu.memory_space<vmem>>, vector<64x16xbf16>,
    %c0_94 = arith.constant 0 : index
    %c0_95 = arith.constant 0 : index
    %84 = vector.load %arg11[%c0_94, %c0_95] : memref<64x288xbf16, #tpu.memory_space<vmem>>, vector<64x144xbf16>
    %c0_96 = arith.constant 0 : index
    %c0_97 = arith.constant 0 : index
    %85 = vector.load %arg4[%c0_96, %c0_97] : memref<144x32xbf16, #tpu.memory_space<vmem>>, vector<144x32xbf16>
    %cst_98 = arith.constant dense<0.000000e+00> : vector<64x32xf32>
    %86 = tpu.matmul %84, %85, %cst_98 {dimension_numbers = #tpu.dot_dimension_numbers<[1], [0], [0], [1], [0, 0, 1, 1], [], []>} : vector<64x144xbf16>, vector<144x32xbf16>, vector<64x32xf32> -> vector<64x32xf32>
    %c0_99 = arith.constant 0 : index
    %c0_100 = arith.constant 0 : index
    %87 = vector.load %arg5[%c0_99, %c0_100] : memref<1x32xf32, #tpu.memory_space<vmem>>, vector<1x32xf32>
    %88 = vector.broadcast %87 : vector<1x32xf32> to vector<64x32xf32>
    %89 = arith.addf %86, %88 : vector<64x32xf32>
    %cst_101 = arith.constant 0.000000e+00 : f32
    %90 = vector.broadcast %cst_101 : f32 to vector<64x32xf32>
    %91 = arith.maximumf %89, %90 : vector<64x32xf32>
    %92 = vector.shape_cast %91 : vector<64x32xf32> to vector<8x8x32xf32>
    %cst_102 = arith.constant 0.000000e+00 : f32
    %93 = vector.broadcast %cst_102 : f32 to vector<10x10x32xf32>
    %c0_103 = arith.constant 0 : index
    %c0_104 = arith.constant 0 : index
    %c0_105 = arith.constant 0 : index
    %94 = vector.load %arg12[%c0_103, %c0_104, %c0_105] : memref<10x10x32xf32, #tpu.memory_space<vmem>>, vector<10x10x32xf32>
    tpu.vector_store %arg12[%c0_103, %c0_104, %c0_105], %93 {strides = array<i32>} : memref<10x10x32xf32, #tpu.memory_space<vmem>>, vector<10x10x32xf32>,
    %c1_106 = arith.constant 1 : index
    %c1_107 = arith.constant 1 : index
    %c0_108 = arith.constant 0 : index
    %95 = vector.load %arg12[%c1_106, %c1_107, %c0_108] : memref<10x10x32xf32, #tpu.memory_space<vmem>>, vector<8x8x32xf32>
    tpu.vector_store %arg12[%c1_106, %c1_107, %c0_108], %92 {strides = array<i32>} : memref<10x10x32xf32, #tpu.memory_space<vmem>>, vector<8x8x32xf32>,
    %c0_109 = arith.constant 0 : index
    %c0_110 = arith.constant 0 : index
    %c0_111 = arith.constant 0 : index
    %96 = vector.load %arg12[%c0_109, %c0_110, %c0_111] : memref<10x10x32xf32, #tpu.memory_space<vmem>>, vector<8x8x32xf32>
    %97 = vector.shape_cast %96 : vector<8x8x32xf32> to vector<64x32xf32>
    %98 = arith.truncf %97 : vector<64x32xf32> to vector<64x32xbf16>
    %c0_112 = arith.constant 0 : index
    %c0_113 = arith.constant 0 : index
    %99 = vector.load %arg11[%c0_112, %c0_113] : memref<64x288xbf16, #tpu.memory_space<vmem>>, vector<64x32xbf16>
    tpu.vector_store %arg11[%c0_112, %c0_113], %98 {strides = array<i32>} : memref<64x288xbf16, #tpu.memory_space<vmem>>, vector<64x32xbf16>,
    %c0_114 = arith.constant 0 : index
    %c1_115 = arith.constant 1 : index
    %c0_116 = arith.constant 0 : index
    %100 = vector.load %arg12[%c0_114, %c1_115, %c0_116] : memref<10x10x32xf32, #tpu.memory_space<vmem>>, vector<8x8x32xf32>
    %101 = vector.shape_cast %100 : vector<8x8x32xf32> to vector<64x32xf32>
    %102 = arith.truncf %101 : vector<64x32xf32> to vector<64x32xbf16>
    %c0_117 = arith.constant 0 : index
    %c32_118 = arith.constant 32 : index
    %103 = vector.load %arg11[%c0_117, %c32_118] : memref<64x288xbf16, #tpu.memory_space<vmem>>, vector<64x32xbf16>
    tpu.vector_store %arg11[%c0_117, %c32_118], %102 {strides = array<i32>} : memref<64x288xbf16, #tpu.memory_space<vmem>>, vector<64x32xbf16>,
    %c0_119 = arith.constant 0 : index
    %c2_120 = arith.constant 2 : index
    %c0_121 = arith.constant 0 : index
    %104 = vector.load %arg12[%c0_119, %c2_120, %c0_121] : memref<10x10x32xf32, #tpu.memory_space<vmem>>, vector<8x8x32xf32>
    %105 = vector.shape_cast %104 : vector<8x8x32xf32> to vector<64x32xf32>
    %106 = arith.truncf %105 : vector<64x32xf32> to vector<64x32xbf16>
    %c0_122 = arith.constant 0 : index
    %c64_123 = arith.constant 64 : index
    %107 = vector.load %arg11[%c0_122, %c64_123] : memref<64x288xbf16, #tpu.memory_space<vmem>>, vector<64x32xbf16>
    tpu.vector_store %arg11[%c0_122, %c64_123], %106 {strides = array<i32>} : memref<64x288xbf16, #tpu.memory_space<vmem>>, vector<64x32xbf16>,
    %c1_124 = arith.constant 1 : index
    %c0_125 = arith.constant 0 : index
    %c0_126 = arith.constant 0 : index
    %108 = vector.load %arg12[%c1_124, %c0_125, %c0_126] : memref<10x10x32xf32, #tpu.memory_space<vmem>>, vector<8x8x32xf32>
    %109 = vector.shape_cast %108 : vector<8x8x32xf32> to vector<64x32xf32>
    %110 = arith.truncf %109 : vector<64x32xf32> to vector<64x32xbf16>
    %c0_127 = arith.constant 0 : index
    %c96_128 = arith.constant 96 : index
    %111 = vector.load %arg11[%c0_127, %c96_128] : memref<64x288xbf16, #tpu.memory_space<vmem>>, vector<64x32xbf16>
    tpu.vector_store %arg11[%c0_127, %c96_128], %110 {strides = array<i32>} : memref<64x288xbf16, #tpu.memory_space<vmem>>, vector<64x32xbf16>,
    %c1_129 = arith.constant 1 : index
    %c1_130 = arith.constant 1 : index
    %c0_131 = arith.constant 0 : index
    %112 = vector.load %arg12[%c1_129, %c1_130, %c0_131] : memref<10x10x32xf32, #tpu.memory_space<vmem>>, vector<8x8x32xf32>
    %113 = vector.shape_cast %112 : vector<8x8x32xf32> to vector<64x32xf32>
    %114 = arith.truncf %113 : vector<64x32xf32> to vector<64x32xbf16>
    %c0_132 = arith.constant 0 : index
    %c128_133 = arith.constant 128 : index
    %115 = vector.load %arg11[%c0_132, %c128_133] : memref<64x288xbf16, #tpu.memory_space<vmem>>, vector<64x32xbf16>
    tpu.vector_store %arg11[%c0_132, %c128_133], %114 {strides = array<i32>} : memref<64x288xbf16, #tpu.memory_space<vmem>>, vector<64x32xbf16>,
    %c1_134 = arith.constant 1 : index
    %c2_135 = arith.constant 2 : index
    %c0_136 = arith.constant 0 : index
    %116 = vector.load %arg12[%c1_134, %c2_135, %c0_136] : memref<10x10x32xf32, #tpu.memory_space<vmem>>, vector<8x8x32xf32>
    %117 = vector.shape_cast %116 : vector<8x8x32xf32> to vector<64x32xf32>
    %118 = arith.truncf %117 : vector<64x32xf32> to vector<64x32xbf16>
    %c0_137 = arith.constant 0 : index
    %c160 = arith.constant 160 : index
    %119 = vector.load %arg11[%c0_137, %c160] : memref<64x288xbf16, #tpu.memory_space<vmem>>, vector<64x32xbf16>
    tpu.vector_store %arg11[%c0_137, %c160], %118 {strides = array<i32>} : memref<64x288xbf16, #tpu.memory_space<vmem>>, vector<64x32xbf16>,
    %c2_138 = arith.constant 2 : index
    %c0_139 = arith.constant 0 : index
    %c0_140 = arith.constant 0 : index
    %120 = vector.load %arg12[%c2_138, %c0_139, %c0_140] : memref<10x10x32xf32, #tpu.memory_space<vmem>>, vector<8x8x32xf32>
    %121 = vector.shape_cast %120 : vector<8x8x32xf32> to vector<64x32xf32>
    %122 = arith.truncf %121 : vector<64x32xf32> to vector<64x32xbf16>
    %c0_141 = arith.constant 0 : index
    %c192 = arith.constant 192 : index
    %123 = vector.load %arg11[%c0_141, %c192] : memref<64x288xbf16, #tpu.memory_space<vmem>>, vector<64x32xbf16>
    tpu.vector_store %arg11[%c0_141, %c192], %122 {strides = array<i32>} : memref<64x288xbf16, #tpu.memory_space<vmem>>, vector<64x32xbf16>,
    %c2_142 = arith.constant 2 : index
    %c1_143 = arith.constant 1 : index
    %c0_144 = arith.constant 0 : index
    %124 = vector.load %arg12[%c2_142, %c1_143, %c0_144] : memref<10x10x32xf32, #tpu.memory_space<vmem>>, vector<8x8x32xf32>
    %125 = vector.shape_cast %124 : vector<8x8x32xf32> to vector<64x32xf32>
    %126 = arith.truncf %125 : vector<64x32xf32> to vector<64x32xbf16>
    %c0_145 = arith.constant 0 : index
    %c224 = arith.constant 224 : index
    %127 = vector.load %arg11[%c0_145, %c224] : memref<64x288xbf16, #tpu.memory_space<vmem>>, vector<64x32xbf16>
    tpu.vector_store %arg11[%c0_145, %c224], %126 {strides = array<i32>} : memref<64x288xbf16, #tpu.memory_space<vmem>>, vector<64x32xbf16>,
    %c2_146 = arith.constant 2 : index
    %c2_147 = arith.constant 2 : index
    %c0_148 = arith.constant 0 : index
    %128 = vector.load %arg12[%c2_146, %c2_147, %c0_148] : memref<10x10x32xf32, #tpu.memory_space<vmem>>, vector<8x8x32xf32>
    %129 = vector.shape_cast %128 : vector<8x8x32xf32> to vector<64x32xf32>
    %130 = arith.truncf %129 : vector<64x32xf32> to vector<64x32xbf16>
    %c0_149 = arith.constant 0 : index
    %c256 = arith.constant 256 : index
    %131 = vector.load %arg11[%c0_149, %c256] : memref<64x288xbf16, #tpu.memory_space<vmem>>, vector<64x32xbf16>
    tpu.vector_store %arg11[%c0_149, %c256], %130 {strides = array<i32>} : memref<64x288xbf16, #tpu.memory_space<vmem>>, vector<64x32xbf16>,
    %c0_150 = arith.constant 0 : index
    %c0_151 = arith.constant 0 : index
    %132 = vector.load %arg11[%c0_150, %c0_151] : memref<64x288xbf16, #tpu.memory_space<vmem>>, vector<64x288xbf16>
    %c0_152 = arith.constant 0 : index
    %c0_153 = arith.constant 0 : index
    %133 = vector.load %arg6[%c0_152, %c0_153] : memref<288x64xbf16, #tpu.memory_space<vmem>>, vector<288x64xbf16>
    %cst_154 = arith.constant dense<0.000000e+00> : vector<64x64xf32>
    %134 = tpu.matmul %132, %133, %cst_154 {dimension_numbers = #tpu.dot_dimension_numbers<[1], [0], [0], [1], [0, 0, 1, 1], [], []>} : vector<64x288xbf16>, vector<288x64xbf16>, vector<64x64xf32> -> vector<64x64xf32>
    %c0_155 = arith.constant 0 : index
    %c0_156 = arith.constant 0 : index
    %135 = vector.load %arg7[%c0_155, %c0_156] : memref<1x64xf32, #tpu.memory_space<vmem>>, vector<1x64xf32>
    %136 = vector.broadcast %135 : vector<1x64xf32> to vector<64x64xf32>
    %137 = arith.addf %134, %136 : vector<64x64xf32>
    %cst_157 = arith.constant 0.000000e+00 : f32
    %138 = vector.broadcast %cst_157 : f32 to vector<64x64xf32>
    %139 = arith.maximumf %137, %138 : vector<64x64xf32>
    %140 = vector.shape_cast %139 : vector<64x64xf32> to vector<8x8x64xf32>
    %141 = vector.shape_cast %140 : vector<8x8x64xf32> to vector<64x64xf32>
    %142 = arith.truncf %141 : vector<64x64xf32> to vector<64x64xbf16>
    %c0_158 = arith.constant 0 : index
    %c0_159 = arith.constant 0 : index
    %143 = vector.load %arg8[%c0_158, %c0_159] : memref<64x128xbf16, #tpu.memory_space<vmem>>, vector<64x128xbf16>
    %cst_160 = arith.constant dense<0.000000e+00> : vector<64x128xf32>
    %144 = tpu.matmul %142, %143, %cst_160 {dimension_numbers = #tpu.dot_dimension_numbers<[1], [0], [0], [1], [0, 0, 1, 1], [], []>} : vector<64x64xbf16>, vector<64x128xbf16>, vector<64x128xf32> -> vector<64x128xf32>
    %c0_161 = arith.constant 0 : index
    %c0_162 = arith.constant 0 : index
    %145 = vector.load %arg9[%c0_161, %c0_162] : memref<1x128xf32, #tpu.memory_space<vmem>>, vector<1x128xf32>
    %146 = vector.broadcast %145 : vector<1x128xf32> to vector<64x128xf32>
    %147 = arith.addf %144, %146 : vector<64x128xf32>
    %cst_163 = arith.constant 0.000000e+00 : f32
    %148 = vector.broadcast %cst_163 : f32 to vector<64x128xf32>
    %149 = arith.maximumf %147, %148 : vector<64x128xf32>
    %150 = vector.shape_cast %149 : vector<64x128xf32> to vector<8x8x128xf32>
    %151 = vector.shape_cast %150 : vector<8x8x128xf32> to vector<64x128xf32>
    %cst_164 = arith.constant dense<0.000000e+00> : vector<128xf32>
    %152 = vector.multi_reduction <add>, %151, %cst_164 [0] : vector<64x128xf32> to vector<128xf32>
    %153 = vector.shape_cast %152 : vector<128xf32> to vector<1x128xf32>
    %cst_165 = arith.constant 6.400000e+01 : f32
    %154 = vector.broadcast %cst_165 : f32 to vector<1x128xf32>
    %155 = arith.divf %153, %154 : vector<1x128xf32>
    %156 = vector.shape_cast %155 : vector<1x128xf32> to vector<1x1x128xf32>
    %c0_166 = arith.constant 0 : index
    %c0_167 = arith.constant 0 : index
    %c0_168 = arith.constant 0 : index
    %157 = vector.load %arg10[%c0_166, %c0_167, %c0_168] : memref<1x1x128xf32, #tpu.memory_space<vmem>>, vector<1x1x128xf32>
    tpu.vector_store %arg10[%c0_166, %c0_167, %c0_168], %156 {strides = array<i32>} : memref<1x1x128xf32, #tpu.memory_space<vmem>>, vector<1x1x128xf32>,
    return
  }
  func.func @transform_0(%arg0: i32) -> (i32, i32, i32, i32) {
    %c0_i32 = arith.constant 0 : i32
    %c0_i32_0 = arith.constant 0 : i32
    %c0_i32_1 = arith.constant 0 : i32
    %c0_i32_2 = arith.constant 0 : i32
    return %arg0, %c0_i32, %c0_i32_0, %c0_i32_1 : i32, i32, i32, i32
  }
  func.func @transform_1(%arg0: i32) -> (i32, i32) {
    %c0_i32 = arith.constant 0 : i32
    %c0_i32_0 = arith.constant 0 : i32
    %c0_i32_1 = arith.constant 0 : i32
    return %c0_i32, %c0_i32_0 : i32, i32
  }
  func.func @transform_2(%arg0: i32) -> (i32, i32) {
    %c0_i32 = arith.constant 0 : i32
    %c0_i32_0 = arith.constant 0 : i32
    %c0_i32_1 = arith.constant 0 : i32
    return %c0_i32, %c0_i32_0 : i32, i32
  }
  func.func @transform_3(%arg0: i32) -> (i32, i32) {
    %c0_i32 = arith.constant 0 : i32
    %c0_i32_0 = arith.constant 0 : i32
    %c0_i32_1 = arith.constant 0 : i32
    return %c0_i32, %c0_i32_0 : i32, i32
  }
  func.func @transform_4(%arg0: i32) -> (i32, i32) {
    %c0_i32 = arith.constant 0 : i32
    %c0_i32_0 = arith.constant 0 : i32
    %c0_i32_1 = arith.constant 0 : i32
    return %c0_i32, %c0_i32_0 : i32, i32
  }
  func.func @transform_5(%arg0: i32) -> (i32, i32) {
    %c0_i32 = arith.constant 0 : i32
    %c0_i32_0 = arith.constant 0 : i32
    %c0_i32_1 = arith.constant 0 : i32
    return %c0_i32, %c0_i32_0 : i32, i32
  }
  func.func @transform_6(%arg0: i32) -> (i32, i32) {
    %c0_i32 = arith.constant 0 : i32
    %c0_i32_0 = arith.constant 0 : i32
    %c0_i32_1 = arith.constant 0 : i32
    return %c0_i32, %c0_i32_0 : i32, i32
  }
  func.func @transform_7(%arg0: i32) -> (i32, i32) {
    %c0_i32 = arith.constant 0 : i32
    %c0_i32_0 = arith.constant 0 : i32
    %c0_i32_1 = arith.constant 0 : i32
    return %c0_i32, %c0_i32_0 : i32, i32
  }
  func.func @transform_8(%arg0: i32) -> (i32, i32) {
    %c0_i32 = arith.constant 0 : i32
    %c0_i32_0 = arith.constant 0 : i32
    %c0_i32_1 = arith.constant 0 : i32
    return %c0_i32, %c0_i32_0 : i32, i32
  }
  func.func @transform_9(%arg0: i32) -> (i32, i32, i32) {
    %c0_i32 = arith.constant 0 : i32
    %c0_i32_0 = arith.constant 0 : i32
    %c0_i32_1 = arith.constant 0 : i32
    return %arg0, %c0_i32, %c0_i32_0 : i32, i32, i32
  }
}

</mosaic_0001>

<llo_original>
// kernel: a_call__.1
$region0: #{a_call__.1}
  #allocation0 [shape = 'u32[]', space=smem, size = 0x4, offset = 0x4, fixed_abs, tag = 'smem constant byte address 0x4 - core index']
  #allocation1 [shape = 'u32[144,128]{1,0:T(1,128)}', space=vmem, size = 0x12000, scoped, tag = 'internal scratch']
  #allocation2 [shape = 'bf16[64,288]{1,0:T(16,128)(2,1)}', space=vmem, size = 0xc000, scoped, tag = 'scratch operand']
  #allocation3 [shape = 'f32[10,10,32]{2,1,0:T(8,128)}', space=vmem, size = 0x14000, scoped, tag = 'scratch operand']
  %s0 = inlined_call_operand.vmem [shape: bf16[2,36,9,8], index: 0, kind: input, shape index: {}]
  %s1 = inlined_call_operand.vmem [shape: bf16[72,16], index: 1, kind: input, shape index: {}]
  %s2 = inlined_call_operand.vmem [shape: f32[1,16], index: 2, kind: input, shape index: {}]
  %s3 = inlined_call_operand.vmem [shape: bf16[144,32], index: 3, kind: input, shape index: {}]
  %s4 = inlined_call_operand.vmem [shape: f32[1,32], index: 4, kind: input, shape index: {}]
  %s5 = inlined_call_operand.vmem [shape: bf16[288,64], index: 5, kind: input, shape index: {}]
  %s6 = inlined_call_operand.vmem [shape: f32[1,64], index: 6, kind: input, shape index: {}]
  %s7 = inlined_call_operand.vmem [shape: bf16[64,128], index: 7, kind: input, shape index: {}]
  %s8 = inlined_call_operand.vmem [shape: f32[1,128], index: 8, kind: input, shape index: {}]
  %s9 = inlined_call_operand.hbm [shape: f32[2,1,128], index: 9, kind: output, shape index: {}]
  %s10 = sld [smem:[#allocation0]]
  $region69: #{a_call__.1} parent=0
    _
  %s12 = ssub.s32 1, %s10
  %s13 = scalar_select 0, %s12, %s10
  $region1: #{a_call__.1} parent=0
    #allocation4 [shape = 'u8[1024]{0}', space=vmem, size = 0x400, scoped, tag = 'output window, operand 0']
    #allocation5 [shape = 's32[2]{0}', space=sflag, size = 0x8, scoped, tag = 'scoped memory for a_call__.1']
    %14 = vsyncpa [#allocation5], 0
    %s15 = scalar_lea.sflag [#allocation5], 1
    %16 = vsyncpa %s15, 0
    loop: start=0, step=1, limit=4
    $region2: #{a_call__.1} parent=1 // loop_pre_header
      _
    $region3: #{a_call__.1} parent=1 // loop_header
      %s18 = sphi 0, %s22
      %p19 = scmp.ge.s32.totalorder %s18, 4
      %s28 = sphi 0, %s30
      %s31 = sphi 0, %s28
      %s32 = sphi 0, %s31
      %s48 = sphi 0, %s32
      %s52 = sphi 0, %s52
      %s54 = sphi 0, %s52
      %s55 = sphi 0, %s54
      %s69 = sphi 0, %s55
      %s73 = sphi 0, %s73
      %s75 = sphi 0, %s73
      %s76 = sphi 0, %s75
      %s90 = sphi 0, %s76
      %s94 = sphi 0, %s94
      %s96 = sphi 0, %s94
      %s97 = sphi 0, %s96
      %s111 = sphi 0, %s97
      %s115 = sphi 0, %s115
      %s117 = sphi 0, %s115
      %s118 = sphi 0, %s117
      %s132 = sphi 0, %s118
      %s136 = sphi 0, %s136
      %s138 = sphi 0, %s136
      %s139 = sphi 0, %s138
      %s153 = sphi 0, %s139
      %s157 = sphi 0, %s157
      %s159 = sphi 0, %s157
      %s160 = sphi 0, %s159
      %s174 = sphi 0, %s160
      %s178 = sphi 0, %s178
      %s180 = sphi 0, %s178
      %s181 = sphi 0, %s180
      %s195 = sphi 0, %s181
      %s199 = sphi 0, %s199
      %s201 = sphi 0, %s199
      %s202 = sphi 0, %s201
      %s216 = sphi 0, %s202
      %s222 = sphi 0, %s224
      %s225 = sphi 0, %s222
      %s226 = sphi 0, %s225
      %s242 = sphi 0, %s226
    $region4: #{a_call__.1} parent=1 // loop_header_branch
      %21 = sbr.rel (%p19) target = $region8
    $region5: #{a_call__.1} parent=1 // loop_body
      %s23 = ssub.s32 %s18, 1
      %s24 = ssub.s32 %s18, 2
      %s25 = sadd.s32 %s18, 1
      %s26 = ssub.s32 %s18, %s25
      %p27 = scmp.eq.s32.totalorder %s26, 0
      %s29 = sadd.s32 %s28, 1
      %s30 = scalar_select %p27, %s28, %s29
      %p33 = pneg %p27
      %p34 = scmp.eq.s32.totalorder %s18, 1
      %p35 = por %p33, %p34
      %p36 = scmp.ne.s32.totalorder %s28, %s31
      %p37 = scmp.eq.s32.totalorder %s18, 0
      %p38 = por %p36, %p37
      %p39 = scmp.ne.s32.totalorder %s28, %s31
      %p40 = scmp.eq.s32.totalorder %s23, 1
      %p41 = por %p39, %p40
      %p42 = scmp.ne.s32.totalorder %s31, %s32
      %p43 = scmp.eq.s32.totalorder %s23, 0
      %p44 = por %p42, %p43
      %p45 = scmp.ne.s32.totalorder %s31, %s32
      %p46 = scmp.eq.s32.totalorder %s24, 1
      %p47 = por %p45, %p46
      %p49 = scmp.ne.s32.totalorder %s32, %s48
      %p50 = scmp.eq.s32.totalorder %s24, 0
      %p51 = por %p49, %p50
      %s53 = sadd.s32 %s52, 1
      %p56 = scmp.eq.s32.totalorder %s18, 1
      %p57 = scmp.ne.s32.totalorder %s52, %s54
      %p58 = scmp.eq.s32.totalorder %s18, 0
      %p59 = por %p57, %p58
      %p60 = scmp.ne.s32.totalorder %s52, %s54
      %p61 = scmp.eq.s32.totalorder %s23, 1
      %p62 = por %p60, %p61
      %p63 = scmp.ne.s32.totalorder %s54, %s55
      %p64 = scmp.eq.s32.totalorder %s23, 0
      %p65 = por %p63, %p64
      %p66 = scmp.ne.s32.totalorder %s54, %s55
      %p67 = scmp.eq.s32.totalorder %s24, 1
      %p68 = por %p66, %p67
      %p70 = scmp.ne.s32.totalorder %s55, %s69
      %p71 = scmp.eq.s32.totalorder %s24, 0
      %p72 = por %p70, %p71
      %s74 = sadd.s32 %s73, 1
      %p77 = scmp.eq.s32.totalorder %s18, 1
      %p78 = scmp.ne.s32.totalorder %s73, %s75
      %p79 = scmp.eq.s32.totalorder %s18, 0
      %p80 = por %p78, %p79
      %p81 = scmp.ne.s32.totalorder %s73, %s75
      %p82 = scmp.eq.s32.totalorder %s23, 1
      %p83 = por %p81, %p82
      %p84 = scmp.ne.s32.totalorder %s75, %s76
      %p85 = scmp.eq.s32.totalorder %s23, 0
      %p86 = por %p84, %p85
      %p87 = scmp.ne.s32.totalorder %s75, %s76
      %p88 = scmp.eq.s32.totalorder %s24, 1
      %p89 = por %p87, %p88
      %p91 = scmp.ne.s32.totalorder %s76, %s90
      %p92 = scmp.eq.s32.totalorder %s24, 0
      %p93 = por %p91, %p92
      %s95 = sadd.s32 %s94, 1
      %p98 = scmp.eq.s32.totalorder %s18, 1
      %p99 = scmp.ne.s32.totalorder %s94, %s96
      %p100 = scmp.eq.s32.totalorder %s18, 0
      %p101 = por %p99, %p100
      %p102 = scmp.ne.s32.totalorder %s94, %s96
      %p103 = scmp.eq.s32.totalorder %s23, 1
      %p104 = por %p102, %p103
      %p105 = scmp.ne.s32.totalorder %s96, %s97
      %p106 = scmp.eq.s32.totalorder %s23, 0
      %p107 = por %p105, %p106
      %p108 = scmp.ne.s32.totalorder %s96, %s97
      %p109 = scmp.eq.s32.totalorder %s24, 1
      %p110 = por %p108, %p109
      %p112 = scmp.ne.s32.totalorder %s97, %s111
      %p113 = scmp.eq.s32.totalorder %s24, 0
      %p114 = por %p112, %p113
      %s116 = sadd.s32 %s115, 1
      %p119 = scmp.eq.s32.totalorder %s18, 1
      %p120 = scmp.ne.s32.totalorder %s115, %s117
      %p121 = scmp.eq.s32.totalorder %s18, 0
      %p122 = por %p120, %p121
      %p123 = scmp.ne.s32.totalorder %s115, %s117
      %p124 = scmp.eq.s32.totalorder %s23, 1
      %p125 = por %p123, %p124
      %p126 = scmp.ne.s32.totalorder %s117, %s118
      %p127 = scmp.eq.s32.totalorder %s23, 0
      %p128 = por %p126, %p127
      %p129 = scmp.ne.s32.totalorder %s117, %s118
      %p130 = scmp.eq.s32.totalorder %s24, 1
      %p131 = por %p129, %p130
      %p133 = scmp.ne.s32.totalorder %s118, %s132
      %p134 = scmp.eq.s32.totalorder %s24, 0
      %p135 = por %p133, %p134
      %s137 = sadd.s32 %s136, 1
      %p140 = scmp.eq.s32.totalorder %s18, 1
      %p141 = scmp.ne.s32.totalorder %s136, %s138
      %p142 = scmp.eq.s32.totalorder %s18, 0
      %p143 = por %p141, %p142
      %p144 = scmp.ne.s32.totalorder %s136, %s138
      %p145 = scmp.eq.s32.totalorder %s23, 1
      %p146 = por %p144, %p145
      %p147 = scmp.ne.s32.totalorder %s138, %s139
      %p148 = scmp.eq.s32.totalorder %s23, 0
      %p149 = por %p147, %p148
      %p150 = scmp.ne.s32.totalorder %s138, %s139
      %p151 = scmp.eq.s32.totalorder %s24, 1
      %p152 = por %p150, %p151
      %p154 = scmp.ne.s32.totalorder %s139, %s153
      %p155 = scmp.eq.s32.totalorder %s24, 0
      %p156 = por %p154, %p155
      %s158 = sadd.s32 %s157, 1
      %p161 = scmp.eq.s32.totalorder %s18, 1
      %p162 = scmp.ne.s32.totalorder %s157, %s159
      %p163 = scmp.eq.s32.totalorder %s18, 0
      %p164 = por %p162, %p163
      %p165 = scmp.ne.s32.totalorder %s157, %s159
      %p166 = scmp.eq.s32.totalorder %s23, 1
      %p167 = por %p165, %p166
      %p168 = scmp.ne.s32.totalorder %s159, %s160
      %p169 = scmp.eq.s32.totalorder %s23, 0
      %p170 = por %p168, %p169
      %p171 = scmp.ne.s32.totalorder %s159, %s160
      %p172 = scmp.eq.s32.totalorder %s24, 1
      %p173 = por %p171, %p172
      %p175 = scmp.ne.s32.totalorder %s160, %s174
      %p176 = scmp.eq.s32.totalorder %s24, 0
      %p177 = por %p175, %p176
      %s179 = sadd.s32 %s178, 1
      %p182 = scmp.eq.s32.totalorder %s18, 1
      %p183 = scmp.ne.s32.totalorder %s178, %s180
      %p184 = scmp.eq.s32.totalorder %s18, 0
      %p185 = por %p183, %p184
      %p186 = scmp.ne.s32.totalorder %s178, %s180
      %p187 = scmp.eq.s32.totalorder %s23, 1
      %p188 = por %p186, %p187
      %p189 = scmp.ne.s32.totalorder %s180, %s181
      %p190 = scmp.eq.s32.totalorder %s23, 0
      %p191 = por %p189, %p190
      %p192 = scmp.ne.s32.totalorder %s180, %s181
      %p193 = scmp.eq.s32.totalorder %s24, 1
      %p194 = por %p192, %p193
      %p196 = scmp.ne.s32.totalorder %s181, %s195
      %p197 = scmp.eq.s32.totalorder %s24, 0
      %p198 = por %p196, %p197
      %s200 = sadd.s32 %s199, 1
      %p203 = scmp.eq.s32.totalorder %s18, 1
      %p204 = scmp.ne.s32.totalorder %s199, %s201
      %p205 = scmp.eq.s32.totalorder %s18, 0
      %p206 = por %p204, %p205
      %p207 = scmp.ne.s32.totalorder %s199, %s201
      %p208 = scmp.eq.s32.totalorder %s23, 1
      %p209 = por %p207, %p208
      %p210 = scmp.ne.s32.totalorder %s201, %s202
      %p211 = scmp.eq.s32.totalorder %s23, 0
      %p212 = por %p210, %p211
      %p213 = scmp.ne.s32.totalorder %s201, %s202
      %p214 = scmp.eq.s32.totalorder %s24, 1
      %p215 = por %p213, %p214
      %p217 = scmp.ne.s32.totalorder %s202, %s216
      %p218 = scmp.eq.s32.totalorder %s24, 0
      %p219 = por %p217, %p218
      %s220 = ssub.s32 %s18, %s25
      %p221 = scmp.eq.s32.totalorder %s220, 0
      %s223 = sadd.s32 %s222, 1
      %s224 = scalar_select %p221, %s222, %s223
      %p227 = pneg %p221
      %p228 = scmp.eq.s32.totalorder %s18, 1
      %p229 = por %p227, %p228
      %p230 = scmp.ne.s32.totalorder %s222, %s225
      %p231 = scmp.eq.s32.totalorder %s18, 0
      %p232 = por %p230, %p231
      %p233 = scmp.ne.s32.totalorder %s222, %s225
      %p234 = scmp.eq.s32.totalorder %s23, 1
      %p235 = por %p233, %p234
      %p236 = scmp.ne.s32.totalorder %s225, %s226
      %p237 = scmp.eq.s32.totalorder %s23, 0
      %p238 = por %p236, %p237
      %p239 = scmp.ne.s32.totalorder %s225, %s226
      %p240 = scmp.eq.s32.totalorder %s24, 1
      %p241 = por %p239, %p240
      %p243 = scmp.ne.s32.totalorder %s226, %s242
      %p244 = scmp.eq.s32.totalorder %s24, 0
      %p245 = por %p243, %p244
      %p246 = scmp.le.s32.totalorder 1, %s18
      %p247 = scmp.lt.s32.totalorder %s18, 3
      %p248 = pnand %p246, %p247
      %p249 = pneg %p248
      // Predicated region
      $region9: #{a_call__.1} parent=5 // pred_check
        _
      $region10: #{a_call__.1} parent=5 // pred_check_branch
        %251 = sbr.rel (%p248) target = $region12
      $region11: #{a_call__.1} parent=5 // pred_region
        %s252 = ssub.s32 %s18, 1
        // Predicated region
        $region13: #{a_call__.1} parent=11 // pred_check
          %p253 = pneg %p65
        $region14: #{a_call__.1} parent=11 // pred_check_branch
          %255 = sbr.rel (%p253) target = $region16
        $region15: #{a_call__.1} parent=11 // pred_region
          _
        $region16: #{a_call__.1} parent=11 // pred_fallthru
          _
        // Predicated region
        $region17: #{a_call__.1} parent=11 // pred_check
          %p256 = pneg %p86
        $region18: #{a_call__.1} parent=11 // pred_check_branch
          %258 = sbr.rel (%p256) target = $region20
        $region19: #{a_call__.1} parent=11 // pred_region
          _
        $region20: #{a_call__.1} parent=11 // pred_fallthru
          _
        // Predicated region
        $region21: #{a_call__.1} parent=11 // pred_check
          %p259 = pneg %p107
        $region22: #{a_call__.1} parent=11 // pred_check_branch
          %261 = sbr.rel (%p259) target = $region24
        $region23: #{a_call__.1} parent=11 // pred_region
          _
        $region24: #{a_call__.1} parent=11 // pred_fallthru
          _
        // Predicated region
        $region25: #{a_call__.1} parent=11 // pred_check
          %p262 = pneg %p128
        $region26: #{a_call__.1} parent=11 // pred_check_branch
          %264 = sbr.rel (%p262) target = $region28
        $region27: #{a_call__.1} parent=11 // pred_region
          _
        $region28: #{a_call__.1} parent=11 // pred_fallthru
          _
        // Predicated region
        $region29: #{a_call__.1} parent=11 // pred_check
          %p265 = pneg %p149
        $region30: #{a_call__.1} parent=11 // pred_check_branch
          %267 = sbr.rel (%p265) target = $region32
        $region31: #{a_call__.1} parent=11 // pred_region
          _
        $region32: #{a_call__.1} parent=11 // pred_fallthru
          _
        // Predicated region
        $region33: #{a_call__.1} parent=11 // pred_check
          %p268 = pneg %p170
        $region34: #{a_call__.1} parent=11 // pred_check_branch
          %270 = sbr.rel (%p268) target = $region36
        $region35: #{a_call__.1} parent=11 // pred_region
          _
        $region36: #{a_call__.1} parent=11 // pred_fallthru
          _
        // Predicated region
        $region37: #{a_call__.1} parent=11 // pred_check
          %p271 = pneg %p191
        $region38: #{a_call__.1} parent=11 // pred_check_branch
          %273 = sbr.rel (%p271) target = $region40
        $region39: #{a_call__.1} parent=11 // pred_region
          _
        $region40: #{a_call__.1} parent=11 // pred_fallthru
          _
        // Predicated region
        $region41: #{a_call__.1} parent=11 // pred_check
          %p274 = pneg %p212
        $region42: #{a_call__.1} parent=11 // pred_check_branch
          %276 = sbr.rel (%p274) target = $region44
        $region43: #{a_call__.1} parent=11 // pred_region
          _
        $region44: #{a_call__.1} parent=11 // pred_fallthru
          _
      $region12: #{a_call__.1} parent=5 // pred_fallthru
        _
      %p277 = scmp.lt.s32.totalorder %s18, 2
      // Predicated region
      $region45: #{a_call__.1} parent=5 // pred_check
        %p278 = pneg %p277
      $region46: #{a_call__.1} parent=5 // pred_check_branch
        %280 = sbr.rel (%p278) target = $region48
      $region47: #{a_call__.1} parent=5 // pred_region
        // Predicated region
        $region49: #{a_call__.1} parent=47 // pred_check
          %p281 = pneg %p38
        $region50: #{a_call__.1} parent=47 // pred_check_branch
          %283 = sbr.rel (%p281) target = $region52
        $region51: #{a_call__.1} parent=47 // pred_region
          %p284 = scmp.lt.s32.totalorder %s18, 1
          %s285 = scalar_select %p284, %s18, 1
          %s286 = smul.addr %s285, 72
          %s287 = smul.addr %s286, 4
          %s288 = scalar_lea.vmem %s0, %s287
        $region52: #{a_call__.1} parent=47 // pred_fallthru
          _
      $region48: #{a_call__.1} parent=5 // pred_fallthru
        _
      %p289 = scmp.le.s32.totalorder 1, %s18
      %p290 = scmp.lt.s32.totalorder %s18, 3
      %p291 = pnand %p289, %p290
      %p292 = pneg %p291
      // Predicated region
      $region53: #{a_call__.1} parent=5 // pred_check
        _
      $region54: #{a_call__.1} parent=5 // pred_check_branch
        %294 = sbr.rel (%p291) target = $region56
      $region55: #{a_call__.1} parent=5 // pred_region
        %s295 = ssub.s32 %s18, 1
        %p296 = scmp.lt.s32.totalorder %s23, 1
        %s297 = scalar_select %p296, %s23, 1
        %s298 = smul.addr %s297, 72
        %s299 = smul.addr %s298, 4
        %s300 = scalar_lea.vmem %s0, %s299
        %p301 = pneg %p44
        %p302 = pneg %p41
        %p303 = pneg %p65
        %p304 = pneg %p62
        %p305 = pneg %p86
        %p306 = pneg %p83
        %p307 = pneg %p107
        %p308 = pneg %p104
        %p309 = pneg %p128
        %p310 = pneg %p125
        %p311 = pneg %p149
        %p312 = pneg %p146
        %p313 = pneg %p170
        %p314 = pneg %p167
        %p315 = pneg %p191
        %p316 = pneg %p188
        %p317 = pneg %p212
        %p318 = pneg %p209
        %p319 = pneg %p238
        %p320 = pneg %p235
        %s321 = sand.u32 %s225, 1
        %s322 = scalar_lea.sflag [#allocation5], %s321
        %s323 = sand.u32 %s225, 1
        %s324 = scalar_lea.vmem [#allocation4], %s323
        %p325 = scmp.lt.s32.totalorder %s23, 1
        %s326 = scalar_select %p325, %s23, 1
        %s327 = smul.addr %s326, 72
        %s328 = smul.addr %s327, 4
        %s329 = scalar_lea.vmem %s0, %s328
        %v331 = vld [vmem:[%s329] sm:$0xf]
        %v332 = vld [vmem:[%s329 + $0x8] sm:$0xf]
        %v333 = vld [vmem:[%s329 + $0x10] sm:$0xf]
        %v334 = vld [vmem:[%s329 + $0x18] sm:$0xf]
        %v335 = vld [vmem:[%s329 + $0x20] sm:$0xf]
        %v336 = vld [vmem:[%s329 + $0x28] sm:$0xf]
        %v337 = vld [vmem:[%s329 + $0x30] sm:$0xf]
        %v338 = vld [vmem:[%s329 + $0x38] sm:$0xf]
        %v347 = vunpack.c.l.b16 %v331
        %v348 = vunpack.c.l.b16 %v332
        %v349 = vunpack.c.l.b16 %v333
        %v350 = vunpack.c.l.b16 %v334
        %v351 = vunpack.c.l.b16 %v335
        %v352 = vunpack.c.l.b16 %v336
        %v353 = vunpack.c.l.b16 %v337
        %v354 = vunpack.c.l.b16 %v338
        %v355 = vpack.c.b16 %v348, %v347
        %v356 = vpack.c.b16 %v350, %v349
        %v357 = vpack.c.b16 %v352, %v351
        %v358 = vpack.c.b16 %v354, %v353
        %vm363 = vcmask 64512
        %364 = vst.msk [vmem:[#allocation2] sm:$0xff] %vm363, %v355
        %365 = vst.msk [vmem:[#allocation2 + $0x18] sm:$0xff] %vm363, %v356
        %366 = vst.msk [vmem:[#allocation2 + $0x30] sm:$0xff] %vm363, %v357
        %367 = vst.msk [vmem:[#allocation2 + $0x48] sm:$0xff] %vm363, %v358
        %s368 = scalar_lea.vmem %s329, 72
        %v369 = vld [vmem:[%s368] sm:$0xf]
        %v370 = vld [vmem:[%s368 + $0x8] sm:$0xf]
        %v371 = vld [vmem:[%s368 + $0x10] sm:$0xf]
        %v372 = vld [vmem:[%s368 + $0x18] sm:$0xf]
        %v373 = vld [vmem:[%s368 + $0x20] sm:$0xf]
        %v374 = vld [vmem:[%s368 + $0x28] sm:$0xf]
        %v375 = vld [vmem:[%s368 + $0x30] sm:$0xf]
        %v376 = vld [vmem:[%s368 + $0x38] sm:$0xf]
        %v385 = vunpack.c.l.b16 %v369
        %v386 = vunpack.c.l.b16 %v370
        %v387 = vunpack.c.l.b16 %v371
        %v388 = vunpack.c.l.b16 %v372
        %v389 = vunpack.c.l.b16 %v373
        %v390 = vunpack.c.l.b16 %v374
        %v391 = vunpack.c.l.b16 %v375
        %v392 = vunpack.c.l.b16 %v376
        %v393 = vpack.c.b16 %v386, %v385
        %v394 = vpack.c.b16 %v388, %v387
        %v395 = vpack.c.b16 %v390, %v389
        %v396 = vpack.c.b16 %v392, %v391
        %397 = vrot.lane.b32.xlu0 %v393, 8
        %v398 = vpop.permute.xlu0 %397
        %399 = vrot.lane.b32.xlu0 %v394, 8
        %v400 = vpop.permute.xlu0 %399
        %401 = vrot.lane.b32.xlu0 %v395, 8
        %v402 = vpop.permute.xlu0 %401
        %403 = vrot.lane.b32.xlu0 %v396, 8
        %v404 = vpop.permute.xlu0 %403
        %vm409 = vcmask 130112
        %410 = vst.msk [vmem:[#allocation2] sm:$0xff] %vm409, %v398
        %411 = vst.msk [vmem:[#allocation2 + $0x18] sm:$0xff] %vm409, %v400
        %412 = vst.msk [vmem:[#allocation2 + $0x30] sm:$0xff] %vm409, %v402
        %413 = vst.msk [vmem:[#allocation2 + $0x48] sm:$0xff] %vm409, %v404
        %v414 = vld [vmem:[%s329] sm:$0xf]
        %v415 = vld [vmem:[%s329 + $0x4] sm:$0x1]
        %v416 = vld [vmem:[%s329 + $0x8] sm:$0xf]
        %v417 = vld [vmem:[%s329 + $0xc] sm:$0x1]
        %v418 = vld [vmem:[%s329 + $0x10] sm:$0xf]
        %v419 = vld [vmem:[%s329 + $0x14] sm:$0x1]
        %v420 = vld [vmem:[%s329 + $0x18] sm:$0xf]
        %v421 = vld [vmem:[%s329 + $0x1c] sm:$0x1]
        %v422 = vld [vmem:[%s329 + $0x20] sm:$0xf]
        %v423 = vld [vmem:[%s329 + $0x24] sm:$0x1]
        %v424 = vld [vmem:[%s329 + $0x28] sm:$0xf]
        %v425 = vld [vmem:[%s329 + $0x2c] sm:$0x1]
        %v426 = vld [vmem:[%s329 + $0x30] sm:$0xf]
        %v427 = vld [vmem:[%s329 + $0x34] sm:$0x1]
        %v428 = vld [vmem:[%s329 + $0x38] sm:$0xf]
        %v429 = vld [vmem:[%s329 + $0x3c] sm:$0x1]
        %vm430 = vsmask.f32 3328
        %vm431 = vsmask.f32 7440
        %vm432 = vmor %vm430, %vm431
        %v434 = vshrl.u32 %v414, 16
        %v436 = vrot.slane %v434, 4
        %v437 = vshll.u32 %v414, 16
        %v439 = vrot.slane %v437, 5
        %v440 = vor.u32 %v436, %v439
        %v441 = vrot.slane %v440, 4
        %v443 = vshll.u32 %v415, 16
        %v445 = vrot.slane %v443, 5
        %v446 = vsel %vm432, %v441, %v445
        %v448 = vshrl.u32 %v416, 16
        %v450 = vrot.slane %v448, 4
        %v451 = vshll.u32 %v416, 16
        %v453 = vrot.slane %v451, 5
        %v454 = vor.u32 %v450, %v453
        %v455 = vrot.slane %v454, 4
        %v457 = vshll.u32 %v417, 16
        %v459 = vrot.slane %v457, 5
        %v460 = vsel %vm432, %v455, %v459
        %v462 = vshrl.u32 %v418, 16
        %v464 = vrot.slane %v462, 4
        %v465 = vshll.u32 %v418, 16
        %v467 = vrot.slane %v465, 5
        %v468 = vor.u32 %v464, %v467
        %v469 = vrot.slane %v468, 4
        %v471 = vshll.u32 %v419, 16
        %v473 = vrot.slane %v471, 5
        %v474 = vsel %vm432, %v469, %v473
        %v476 = vshrl.u32 %v420, 16
        %v478 = vrot.slane %v476, 4
        %v479 = vshll.u32 %v420, 16
        %v481 = vrot.slane %v479, 5
        %v482 = vor.u32 %v478, %v481
        %v483 = vrot.slane %v482, 4
        %v485 = vshll.u32 %v421, 16
        %v487 = vrot.slane %v485, 5
        %v488 = vsel %vm432, %v483, %v487
        %v490 = vshrl.u32 %v422, 16
        %v492 = vrot.slane %v490, 4
        %v493 = vshll.u32 %v422, 16
        %v495 = vrot.slane %v493, 5
        %v496 = vor.u32 %v492, %v495
        %v497 = vrot.slane %v496, 4
        %v499 = vshll.u32 %v423, 16
        %v501 = vrot.slane %v499, 5
        %v502 = vsel %vm432, %v497, %v501
        %v504 = vshrl.u32 %v424, 16
        %v506 = vrot.slane %v504, 4
        %v507 = vshll.u32 %v424, 16
        %v509 = vrot.slane %v507, 5
        %v510 = vor.u32 %v506, %v509
        %v511 = vrot.slane %v510, 4
        %v513 = vshll.u32 %v425, 16
        %v515 = vrot.slane %v513, 5
        %v516 = vsel %vm432, %v511, %v515
        %v518 = vshrl.u32 %v426, 16
        %v520 = vrot.slane %v518, 4
        %v521 = vshll.u32 %v426, 16
        %v523 = vrot.slane %v521, 5
        %v524 = vor.u32 %v520, %v523
        %v525 = vrot.slane %v524, 4
        %v527 = vshll.u32 %v427, 16
        %v529 = vrot.slane %v527, 5
        %v530 = vsel %vm432, %v525, %v529
        %v532 = vshrl.u32 %v428, 16
        %v534 = vrot.slane %v532, 4
        %v535 = vshll.u32 %v428, 16
        %v537 = vrot.slane %v535, 5
        %v538 = vor.u32 %v534, %v537
        %v539 = vrot.slane %v538, 4
        %v541 = vshll.u32 %v429, 16
        %v543 = vrot.slane %v541, 5
        %v544 = vsel %vm432, %v539, %v543
        %v545 = vunpack.c.l.b16 %v446
        %v546 = vunpack.c.l.b16 %v460
        %v547 = vunpack.c.l.b16 %v474
        %v548 = vunpack.c.l.b16 %v488
        %v549 = vunpack.c.l.b16 %v502
        %v550 = vunpack.c.l.b16 %v516
        %v551 = vunpack.c.l.b16 %v530
        %v552 = vunpack.c.l.b16 %v544
        %v553 = vpack.c.b16 %v546, %v545
        %v554 = vpack.c.b16 %v548, %v547
        %v555 = vpack.c.b16 %v550, %v549
        %v556 = vpack.c.b16 %v552, %v551
        %557 = vrot.lane.b32.xlu0 %v553, 16
        %v558 = vpop.permute.xlu0 %557
        %559 = vrot.lane.b32.xlu0 %v554, 16
        %v560 = vpop.permute.xlu0 %559
        %561 = vrot.lane.b32.xlu0 %v555, 16
        %v562 = vpop.permute.xlu0 %561
        %563 = vrot.lane.b32.xlu0 %v556, 16
        %v564 = vpop.permute.xlu0 %563
        %vm569 = vcmask 195712
        %570 = vst.msk [vmem:[#allocation2] sm:$0xff] %vm569, %v558
        %571 = vst.msk [vmem:[#allocation2 + $0x18] sm:$0xff] %vm569, %v560
        %572 = vst.msk [vmem:[#allocation2 + $0x30] sm:$0xff] %vm569, %v562
        %573 = vst.msk [vmem:[#allocation2 + $0x48] sm:$0xff] %vm569, %v564
        %s574 = scalar_lea.vmem %s329, 144
        %v575 = vld [vmem:[%s574] sm:$0xf]
        %v576 = vld [vmem:[%s574 + $0x8] sm:$0xf]
        %v577 = vld [vmem:[%s574 + $0x10] sm:$0xf]
        %v578 = vld [vmem:[%s574 + $0x18] sm:$0xf]
        %v579 = vld [vmem:[%s574 + $0x20] sm:$0xf]
        %v580 = vld [vmem:[%s574 + $0x28] sm:$0xf]
        %v581 = vld [vmem:[%s574 + $0x30] sm:$0xf]
        %v582 = vld [vmem:[%s574 + $0x38] sm:$0xf]
        %v591 = vunpack.c.l.b16 %v575
        %v592 = vunpack.c.l.b16 %v576
        %v593 = vunpack.c.l.b16 %v577
        %v594 = vunpack.c.l.b16 %v578
        %v595 = vunpack.c.l.b16 %v579
        %v596 = vunpack.c.l.b16 %v580
        %v597 = vunpack.c.l.b16 %v581
        %v598 = vunpack.c.l.b16 %v582
        %v599 = vpack.c.b16 %v592, %v591
        %v600 = vpack.c.b16 %v594, %v593
        %v601 = vpack.c.b16 %v596, %v595
        %v602 = vpack.c.b16 %v598, %v597
        %603 = vrot.lane.b32.xlu0 %v599, 24
        %v604 = vpop.permute.xlu0 %603
        %605 = vrot.lane.b32.xlu0 %v600, 24
        %v606 = vpop.permute.xlu0 %605
        %607 = vrot.lane.b32.xlu0 %v601, 24
        %v608 = vpop.permute.xlu0 %607
        %609 = vrot.lane.b32.xlu0 %v602, 24
        %v610 = vpop.permute.xlu0 %609
        %vm615 = vcmask 261312
        %616 = vst.msk [vmem:[#allocation2] sm:$0xff] %vm615, %v604
        %617 = vst.msk [vmem:[#allocation2 + $0x18] sm:$0xff] %vm615, %v606
        %618 = vst.msk [vmem:[#allocation2 + $0x30] sm:$0xff] %vm615, %v608
        %619 = vst.msk [vmem:[#allocation2 + $0x48] sm:$0xff] %vm615, %v610
        %s620 = scalar_lea.vmem %s329, 216
        %v621 = vld [vmem:[%s620] sm:$0xf]
        %v622 = vld [vmem:[%s620 + $0x8] sm:$0xf]
        %v623 = vld [vmem:[%s620 + $0x10] sm:$0xf]
        %v624 = vld [vmem:[%s620 + $0x18] sm:$0xf]
        %v625 = vld [vmem:[%s620 + $0x20] sm:$0xf]
        %v626 = vld [vmem:[%s620 + $0x28] sm:$0xf]
        %v627 = vld [vmem:[%s620 + $0x30] sm:$0xf]
        %v628 = vld [vmem:[%s620 + $0x38] sm:$0xf]
        %v637 = vunpack.c.l.b16 %v621
        %v638 = vunpack.c.l.b16 %v622
        %v639 = vunpack.c.l.b16 %v623
        %v640 = vunpack.c.l.b16 %v624
        %v641 = vunpack.c.l.b16 %v625
        %v642 = vunpack.c.l.b16 %v626
        %v643 = vunpack.c.l.b16 %v627
        %v644 = vunpack.c.l.b16 %v628
        %v645 = vpack.c.b16 %v638, %v637
        %v646 = vpack.c.b16 %v640, %v639
        %v647 = vpack.c.b16 %v642, %v641
        %v648 = vpack.c.b16 %v644, %v643
        %649 = vrot.lane.b32.xlu0 %v645, 32
        %v650 = vpop.permute.xlu0 %649
        %651 = vrot.lane.b32.xlu0 %v646, 32
        %v652 = vpop.permute.xlu0 %651
        %653 = vrot.lane.b32.xlu0 %v647, 32
        %v654 = vpop.permute.xlu0 %653
        %655 = vrot.lane.b32.xlu0 %v648, 32
        %v656 = vpop.permute.xlu0 %655
        %vm661 = vcmask 326912
        %662 = vst.msk [vmem:[#allocation2] sm:$0xff] %vm661, %v650
        %663 = vst.msk [vmem:[#allocation2 + $0x18] sm:$0xff] %vm661, %v652
        %664 = vst.msk [vmem:[#allocation2 + $0x30] sm:$0xff] %vm661, %v654
        %665 = vst.msk [vmem:[#allocation2 + $0x48] sm:$0xff] %vm661, %v656
        %v666 = vld [vmem:[%s574] sm:$0xf]
        %v667 = vld [vmem:[%s574 + $0x4] sm:$0x1]
        %v668 = vld [vmem:[%s574 + $0x8] sm:$0xf]
        %v669 = vld [vmem:[%s574 + $0xc] sm:$0x1]
        %v670 = vld [vmem:[%s574 + $0x10] sm:$0xf]
        %v671 = vld [vmem:[%s574 + $0x14] sm:$0x1]
        %v672 = vld [vmem:[%s574 + $0x18] sm:$0xf]
        %v673 = vld [vmem:[%s574 + $0x1c] sm:$0x1]
        %v674 = vld [vmem:[%s574 + $0x20] sm:$0xf]
        %v675 = vld [vmem:[%s574 + $0x24] sm:$0x1]
        %v676 = vld [vmem:[%s574 + $0x28] sm:$0xf]
        %v677 = vld [vmem:[%s574 + $0x2c] sm:$0x1]
        %v678 = vld [vmem:[%s574 + $0x30] sm:$0xf]
        %v679 = vld [vmem:[%s574 + $0x34] sm:$0x1]
        %v680 = vld [vmem:[%s574 + $0x38] sm:$0xf]
        %v681 = vld [vmem:[%s574 + $0x3c] sm:$0x1]
        %v683 = vshrl.u32 %v666, 16
        %v685 = vrot.slane %v683, 4
        %v686 = vshll.u32 %v666, 16
        %v688 = vrot.slane %v686, 5
        %v689 = vor.u32 %v685, %v688
        %v690 = vrot.slane %v689, 4
        %v692 = vshll.u32 %v667, 16
        %v694 = vrot.slane %v692, 5
        %v695 = vsel %vm432, %v690, %v694
        %v697 = vshrl.u32 %v668, 16
        %v699 = vrot.slane %v697, 4
        %v700 = vshll.u32 %v668, 16
        %v702 = vrot.slane %v700, 5
        %v703 = vor.u32 %v699, %v702
        %v704 = vrot.slane %v703, 4
        %v706 = vshll.u32 %v669, 16
        %v708 = vrot.slane %v706, 5
        %v709 = vsel %vm432, %v704, %v708
        %v711 = vshrl.u32 %v670, 16
        %v713 = vrot.slane %v711, 4
        %v714 = vshll.u32 %v670, 16
        %v716 = vrot.slane %v714, 5
        %v717 = vor.u32 %v713, %v716
        %v718 = vrot.slane %v717, 4
        %v720 = vshll.u32 %v671, 16
        %v722 = vrot.slane %v720, 5
        %v723 = vsel %vm432, %v718, %v722
        %v725 = vshrl.u32 %v672, 16
        %v727 = vrot.slane %v725, 4
        %v728 = vshll.u32 %v672, 16
        %v730 = vrot.slane %v728, 5
        %v731 = vor.u32 %v727, %v730
        %v732 = vrot.slane %v731, 4
        %v734 = vshll.u32 %v673, 16
        %v736 = vrot.slane %v734, 5
        %v737 = vsel %vm432, %v732, %v736
        %v739 = vshrl.u32 %v674, 16
        %v741 = vrot.slane %v739, 4
        %v742 = vshll.u32 %v674, 16
        %v744 = vrot.slane %v742, 5
        %v745 = vor.u32 %v741, %v744
        %v746 = vrot.slane %v745, 4
        %v748 = vshll.u32 %v675, 16
        %v750 = vrot.slane %v748, 5
        %v751 = vsel %vm432, %v746, %v750
        %v753 = vshrl.u32 %v676, 16
        %v755 = vrot.slane %v753, 4
        %v756 = vshll.u32 %v676, 16
        %v758 = vrot.slane %v756, 5
        %v759 = vor.u32 %v755, %v758
        %v760 = vrot.slane %v759, 4
        %v762 = vshll.u32 %v677, 16
        %v764 = vrot.slane %v762, 5
        %v765 = vsel %vm432, %v760, %v764
        %v767 = vshrl.u32 %v678, 16
        %v769 = vrot.slane %v767, 4
        %v770 = vshll.u32 %v678, 16
        %v772 = vrot.slane %v770, 5
        %v773 = vor.u32 %v769, %v772
        %v774 = vrot.slane %v773, 4
        %v776 = vshll.u32 %v679, 16
        %v778 = vrot.slane %v776, 5
        %v779 = vsel %vm432, %v774, %v778
        %v781 = vshrl.u32 %v680, 16
        %v783 = vrot.slane %v781, 4
        %v784 = vshll.u32 %v680, 16
        %v786 = vrot.slane %v784, 5
        %v787 = vor.u32 %v783, %v786
        %v788 = vrot.slane %v787, 4
        %v790 = vshll.u32 %v681, 16
        %v792 = vrot.slane %v790, 5
        %v793 = vsel %vm432, %v788, %v792
        %v794 = vunpack.c.l.b16 %v695
        %v795 = vunpack.c.l.b16 %v709
        %v796 = vunpack.c.l.b16 %v723
        %v797 = vunpack.c.l.b16 %v737
        %v798 = vunpack.c.l.b16 %v751
        %v799 = vunpack.c.l.b16 %v765
        %v800 = vunpack.c.l.b16 %v779
        %v801 = vunpack.c.l.b16 %v793
        %v802 = vpack.c.b16 %v795, %v794
        %v803 = vpack.c.b16 %v797, %v796
        %v804 = vpack.c.b16 %v799, %v798
        %v805 = vpack.c.b16 %v801, %v800
        %806 = vrot.lane.b32.xlu0 %v802, 40
        %v807 = vpop.permute.xlu0 %806
        %808 = vrot.lane.b32.xlu0 %v803, 40
        %v809 = vpop.permute.xlu0 %808
        %810 = vrot.lane.b32.xlu0 %v804, 40
        %v811 = vpop.permute.xlu0 %810
        %812 = vrot.lane.b32.xlu0 %v805, 40
        %v813 = vpop.permute.xlu0 %812
        %vm818 = vcmask 392512
        %819 = vst.msk [vmem:[#allocation2] sm:$0xff] %vm818, %v807
        %820 = vst.msk [vmem:[#allocation2 + $0x18] sm:$0xff] %vm818, %v809
        %821 = vst.msk [vmem:[#allocation2 + $0x30] sm:$0xff] %vm818, %v811
        %822 = vst.msk [vmem:[#allocation2 + $0x48] sm:$0xff] %vm818, %v813
        %s823 = scalar_lea.vmem %s329, 8
        %v824 = vld [vmem:[%s823] sm:$0xf]
        %v825 = vld [vmem:[%s823 + $0x8] sm:$0xf]
        %v826 = vld [vmem:[%s823 + $0x10] sm:$0xf]
        %v827 = vld [vmem:[%s823 + $0x18] sm:$0xf]
        %v828 = vld [vmem:[%s823 + $0x20] sm:$0xf]
        %v829 = vld [vmem:[%s823 + $0x28] sm:$0xf]
        %v830 = vld [vmem:[%s823 + $0x30] sm:$0xf]
        %v831 = vld [vmem:[%s823 + $0x38] sm:$0xf]
        %v840 = vunpack.c.l.b16 %v824
        %v841 = vunpack.c.l.b16 %v825
        %v842 = vunpack.c.l.b16 %v826
        %v843 = vunpack.c.l.b16 %v827
        %v844 = vunpack.c.l.b16 %v828
        %v845 = vunpack.c.l.b16 %v829
        %v846 = vunpack.c.l.b16 %v830
        %v847 = vunpack.c.l.b16 %v831
        %v848 = vpack.c.b16 %v841, %v840
        %v849 = vpack.c.b16 %v843, %v842
        %v850 = vpack.c.b16 %v845, %v844
        %v851 = vpack.c.b16 %v847, %v846
        %852 = vrot.lane.b32.xlu0 %v848, 48
        %v853 = vpop.permute.xlu0 %852
        %854 = vrot.lane.b32.xlu0 %v849, 48
        %v855 = vpop.permute.xlu0 %854
        %856 = vrot.lane.b32.xlu0 %v850, 48
        %v857 = vpop.permute.xlu0 %856
        %858 = vrot.lane.b32.xlu0 %v851, 48
        %v859 = vpop.permute.xlu0 %858
        %vm864 = vcmask 458112
        %865 = vst.msk [vmem:[#allocation2] sm:$0xff] %vm864, %v853
        %866 = vst.msk [vmem:[#allocation2 + $0x18] sm:$0xff] %vm864, %v855
        %867 = vst.msk [vmem:[#allocation2 + $0x30] sm:$0xff] %vm864, %v857
        %868 = vst.msk [vmem:[#allocation2 + $0x48] sm:$0xff] %vm864, %v859
        %s869 = scalar_lea.vmem %s329, 80
        %v870 = vld [vmem:[%s869] sm:$0xf]
        %v871 = vld [vmem:[%s869 + $0x8] sm:$0xf]
        %v872 = vld [vmem:[%s869 + $0x10] sm:$0xf]
        %v873 = vld [vmem:[%s869 + $0x18] sm:$0xf]
        %v874 = vld [vmem:[%s869 + $0x20] sm:$0xf]
        %v875 = vld [vmem:[%s869 + $0x28] sm:$0xf]
        %v876 = vld [vmem:[%s869 + $0x30] sm:$0xf]
        %v877 = vld [vmem:[%s869 + $0x38] sm:$0xf]
        %v886 = vunpack.c.l.b16 %v870
        %v887 = vunpack.c.l.b16 %v871
        %v888 = vunpack.c.l.b16 %v872
        %v889 = vunpack.c.l.b16 %v873
        %v890 = vunpack.c.l.b16 %v874
        %v891 = vunpack.c.l.b16 %v875
        %v892 = vunpack.c.l.b16 %v876
        %v893 = vunpack.c.l.b16 %v877
        %v894 = vpack.c.b16 %v887, %v886
        %v895 = vpack.c.b16 %v889, %v888
        %v896 = vpack.c.b16 %v891, %v890
        %v897 = vpack.c.b16 %v893, %v892
        %898 = vrot.lane.b32.xlu0 %v894, 56
        %v899 = vpop.permute.xlu0 %898
        %900 = vrot.lane.b32.xlu0 %v895, 56
        %v901 = vpop.permute.xlu0 %900
        %902 = vrot.lane.b32.xlu0 %v896, 56
        %v903 = vpop.permute.xlu0 %902
        %904 = vrot.lane.b32.xlu0 %v897, 56
        %v905 = vpop.permute.xlu0 %904
        %vm910 = vcmask 523712
        %911 = vst.msk [vmem:[#allocation2] sm:$0xff] %vm910, %v899
        %912 = vst.msk [vmem:[#allocation2 + $0x18] sm:$0xff] %vm910, %v901
        %913 = vst.msk [vmem:[#allocation2 + $0x30] sm:$0xff] %vm910, %v903
        %914 = vst.msk [vmem:[#allocation2 + $0x48] sm:$0xff] %vm910, %v905
        %v915 = vld [vmem:[%s823] sm:$0xf]
        %v916 = vld [vmem:[%s823 + $0x4] sm:$0x1]
        %v917 = vld [vmem:[%s823 + $0x8] sm:$0xf]
        %v918 = vld [vmem:[%s823 + $0xc] sm:$0x1]
        %v919 = vld [vmem:[%s823 + $0x10] sm:$0xf]
        %v920 = vld [vmem:[%s823 + $0x14] sm:$0x1]
        %v921 = vld [vmem:[%s823 + $0x18] sm:$0xf]
        %v922 = vld [vmem:[%s823 + $0x1c] sm:$0x1]
        %v923 = vld [vmem:[%s823 + $0x20] sm:$0xf]
        %v924 = vld [vmem:[%s823 + $0x24] sm:$0x1]
        %v925 = vld [vmem:[%s823 + $0x28] sm:$0xf]
        %v926 = vld [vmem:[%s823 + $0x2c] sm:$0x1]
        %v927 = vld [vmem:[%s823 + $0x30] sm:$0xf]
        %v928 = vld [vmem:[%s823 + $0x34] sm:$0x1]
        %v929 = vld [vmem:[%s823 + $0x38] sm:$0xf]
        %v930 = vld [vmem:[%s823 + $0x3c] sm:$0x1]
        %v932 = vshrl.u32 %v915, 16
        %v934 = vrot.slane %v932, 4
        %v935 = vshll.u32 %v915, 16
        %v937 = vrot.slane %v935, 5
        %v938 = vor.u32 %v934, %v937
        %v939 = vrot.slane %v938, 4
        %v941 = vshll.u32 %v916, 16
        %v943 = vrot.slane %v941, 5
        %v944 = vsel %vm432, %v939, %v943
        %v946 = vshrl.u32 %v917, 16
        %v948 = vrot.slane %v946, 4
        %v949 = vshll.u32 %v917, 16
        %v951 = vrot.slane %v949, 5
        %v952 = vor.u32 %v948, %v951
        %v953 = vrot.slane %v952, 4
        %v955 = vshll.u32 %v918, 16
        %v957 = vrot.slane %v955, 5
        %v958 = vsel %vm432, %v953, %v957
        %v960 = vshrl.u32 %v919, 16
        %v962 = vrot.slane %v960, 4
        %v963 = vshll.u32 %v919, 16
        %v965 = vrot.slane %v963, 5
        %v966 = vor.u32 %v962, %v965
        %v967 = vrot.slane %v966, 4
        %v969 = vshll.u32 %v920, 16
        %v971 = vrot.slane %v969, 5
        %v972 = vsel %vm432, %v967, %v971
        %v974 = vshrl.u32 %v921, 16
        %v976 = vrot.slane %v974, 4
        %v977 = vshll.u32 %v921, 16
        %v979 = vrot.slane %v977, 5
        %v980 = vor.u32 %v976, %v979
        %v981 = vrot.slane %v980, 4
        %v983 = vshll.u32 %v922, 16
        %v985 = vrot.slane %v983, 5
        %v986 = vsel %vm432, %v981, %v985
        %v988 = vshrl.u32 %v923, 16
        %v990 = vrot.slane %v988, 4
        %v991 = vshll.u32 %v923, 16
        %v993 = vrot.slane %v991, 5
        %v994 = vor.u32 %v990, %v993
        %v995 = vrot.slane %v994, 4
        %v997 = vshll.u32 %v924, 16
        %v999 = vrot.slane %v997, 5
        %v1000 = vsel %vm432, %v995, %v999
        %v1002 = vshrl.u32 %v925, 16
        %v1004 = vrot.slane %v1002, 4
        %v1005 = vshll.u32 %v925, 16
        %v1007 = vrot.slane %v1005, 5
        %v1008 = vor.u32 %v1004, %v1007
        %v1009 = vrot.slane %v1008, 4
        %v1011 = vshll.u32 %v926, 16
        %v1013 = vrot.slane %v1011, 5
        %v1014 = vsel %vm432, %v1009, %v1013
        %v1016 = vshrl.u32 %v927, 16
        %v1018 = vrot.slane %v1016, 4
        %v1019 = vshll.u32 %v927, 16
        %v1021 = vrot.slane %v1019, 5
        %v1022 = vor.u32 %v1018, %v1021
        %v1023 = vrot.slane %v1022, 4
        %v1025 = vshll.u32 %v928, 16
        %v1027 = vrot.slane %v1025, 5
        %v1028 = vsel %vm432, %v1023, %v1027
        %v1030 = vshrl.u32 %v929, 16
        %v1032 = vrot.slane %v1030, 4
        %v1033 = vshll.u32 %v929, 16
        %v1035 = vrot.slane %v1033, 5
        %v1036 = vor.u32 %v1032, %v1035
        %v1037 = vrot.slane %v1036, 4
        %v1039 = vshll.u32 %v930, 16
        %v1041 = vrot.slane %v1039, 5
        %v1042 = vsel %vm432, %v1037, %v1041
        %v1043 = vunpack.c.l.b16 %v944
        %v1044 = vunpack.c.l.b16 %v958
        %v1045 = vunpack.c.l.b16 %v972
        %v1046 = vunpack.c.l.b16 %v986
        %v1047 = vunpack.c.l.b16 %v1000
        %v1048 = vunpack.c.l.b16 %v1014
        %v1049 = vunpack.c.l.b16 %v1028
        %v1050 = vunpack.c.l.b16 %v1042
        %v1051 = vpack.c.b16 %v1044, %v1043
        %v1052 = vpack.c.b16 %v1046, %v1045
        %v1053 = vpack.c.b16 %v1048, %v1047
        %v1054 = vpack.c.b16 %v1050, %v1049
        %1055 = vrot.lane.b32.xlu0 %v1051, 64
        %v1056 = vpop.permute.xlu0 %1055
        %1057 = vrot.lane.b32.xlu0 %v1052, 64
        %v1058 = vpop.permute.xlu0 %1057
        %1059 = vrot.lane.b32.xlu0 %v1053, 64
        %v1060 = vpop.permute.xlu0 %1059
        %1061 = vrot.lane.b32.xlu0 %v1054, 64
        %v1062 = vpop.permute.xlu0 %1061
        %vm1067 = vcmask 589312
        %1068 = vst.msk [vmem:[#allocation2] sm:$0xff] %vm1067, %v1056
        %1069 = vst.msk [vmem:[#allocation2 + $0x18] sm:$0xff] %vm1067, %v1058
        %1070 = vst.msk [vmem:[#allocation2 + $0x30] sm:$0xff] %vm1067, %v1060
        %1071 = vst.msk [vmem:[#allocation2 + $0x48] sm:$0xff] %vm1067, %v1062
        %v1072 = vld [vmem:[#allocation2] sm:$0xff]
        %v1073 = vld [vmem:[#allocation2 + $0x18] sm:$0xff]
        %v1074 = vld [vmem:[#allocation2 + $0x30] sm:$0xff]
        %v1075 = vld [vmem:[#allocation2 + $0x48] sm:$0xff]
        %v1076 = vld [vmem:[%s1] sm:$0xf]
        %v1077 = vld [vmem:[%s1 + $0x4] sm:$0xf]
        %v1078 = vld [vmem:[%s1 + $0x8] sm:$0xf]
        %v1079 = vld [vmem:[%s1 + $0xc] sm:$0xf]
        %v1080 = vld [vmem:[%s1 + $0x10] sm:$0xf]
        %v1081 = vld [vmem:[%s1 + $0x14] sm:$0xf]
        %v1082 = vld [vmem:[%s1 + $0x18] sm:$0xf]
        %v1083 = vld [vmem:[%s1 + $0x1c] sm:$0xf]
        %v1084 = vld [vmem:[%s1 + $0x20] sm:$0xf]
        %v1085 = vld [vmem:[%s2] sm:$0x1]
        %v1087 = vlaneseq
        %v1088 = vshrl.u32 %v1087, 7
        %v1089 = vsub.s32 0, %v1088
        %v1090 = vrot.slane %v1085, %v1089
        %v1101 = vunpack.c.l.b16 %v1076
        %v1102 = vunpack.c.l.b16 %v1077
        %v1103 = vunpack.c.l.b16 %v1078
        %v1104 = vunpack.c.l.b16 %v1079
        %v1105 = vunpack.c.l.b16 %v1080
        %v1106 = vunpack.c.l.b16 %v1081
        %v1107 = vunpack.c.l.b16 %v1082
        %v1108 = vunpack.c.l.b16 %v1083
        %v1109 = vunpack.c.l.b16 %v1084
        %v1110 = vpack.c.b16 %v1102, %v1101
        %v1111 = vpack.c.b16 %v1104, %v1103
        %v1112 = vpack.c.b16 %v1106, %v1105
        %v1113 = vpack.c.b16 %v1108, %v1107
        %v1114 = vpack.c.b16 %v1109, %v1109
        %vm1119 = vcmask 588800
        %v1121 = vsel %vm1119, %v1072, 0
        %v1124 = vsel %vm1119, %v1073, 0
        %v1127 = vsel %vm1119, %v1074, 0
        %v1130 = vsel %vm1119, %v1075, 0
        %vm1132 = vcmask 1043456
        %v1134 = vsel %vm1132, %v1114, 0
        %1136 = vmatprep.subr.bf16.mxu0 0
        %1137 = vmatpush1.bf16.msra.mxu0 %v1110
        %1138 = vmatprep.subr.bf16.mxu0 0
        %1139 = vmatpush1.bf16.msra.mxu0 %v1111
        %1140 = vmatprep.subr.bf16.mxu0 0
        %1141 = vmatpush1.bf16.msra.mxu0 %v1112
        %1142 = vmatprep.subr.bf16.mxu0 0
        %1143 = vmatpush1.bf16.msra.mxu0 %v1113
        %1144 = vmatprep.subr.bf16.mxu0 0
        %1145 = vmatpush1.bf16.msra.mxu0 %v1134
        %1146 = vmatprep.subr.bf16.mxu0 0
        %1147 = vmatpush1.bf16.msra.mxu0 0
        %1148 = vmatprep.subr.bf16.mxu0 0
        %1149 = vmatpush1.bf16.msra.mxu0 0
        %1150 = vmatprep.subr.bf16.mxu0 0
        %1151 = vmatpush1.bf16.msra.mxu0 0
        %1152 = vmatprep.subr.bf16.mxu0 0
        %1153 = vmatpush1.bf16.msra.mxu0 0
        %1154 = vmatprep.subr.bf16.mxu0 0
        %1155 = vmatpush1.bf16.msra.mxu0 0
        %1156 = vmatprep.subr.bf16.mxu0 0
        %1157 = vmatpush1.bf16.msra.mxu0 0
        %1158 = vmatprep.subr.bf16.mxu0 0
        %1159 = vmatpush1.bf16.msra.mxu0 0
        %1160 = vmatprep.subr.bf16.mxu0 0
        %1161 = vmatpush1.bf16.msra.mxu0 0
        %1162 = vmatprep.subr.bf16.mxu0 0
        %1163 = vmatpush1.bf16.msra.mxu0 0
        %1164 = vmatprep.subr.bf16.mxu0 0
        %1165 = vmatpush1.bf16.msra.mxu0 0
        %1166 = vmatprep.subr.bf16.mxu0 0
        %1167 = vmatpush1.bf16.msra.mxu0 0
        %1168 = vmatprep.mubr.bf16.mxu0 0
        %1169 = vmatmul.mubr.bf16.gmra.mrb[0].mxu0 %v1121
        %v1170 = vpop.f32.mrb[0].mxu0
        %v1171 = vadd.f32 %v1090, %v1170
        %v1172 = vpop.f32.mrb[0].mxu0
        %v1173 = vpop.f32.mrb[0].mxu0
        %v1174 = vadd.f32 %v1090, %v1173
        %v1175 = vpop.f32.mrb[0].mxu0
        %1176 = vmatprep.mubr.bf16.mxu0 0
        %1177 = vmatmul.mubr.bf16.gmra.mrb[0].mxu0 %v1124
        %v1178 = vpop.f32.mrb[0].mxu0
        %v1179 = vadd.f32 %v1090, %v1178
        %v1180 = vpop.f32.mrb[0].mxu0
        %v1181 = vpop.f32.mrb[0].mxu0
        %v1182 = vadd.f32 %v1090, %v1181
        %v1183 = vpop.f32.mrb[0].mxu0
        %1184 = vmatprep.mubr.bf16.mxu0 0
        %1185 = vmatmul.mubr.bf16.gmra.mrb[0].mxu0 %v1127
        %v1186 = vpop.f32.mrb[0].mxu0
        %v1187 = vadd.f32 %v1090, %v1186
        %v1188 = vpop.f32.mrb[0].mxu0
        %v1189 = vpop.f32.mrb[0].mxu0
        %v1190 = vadd.f32 %v1090, %v1189
        %v1191 = vpop.f32.mrb[0].mxu0
        %1192 = vmatprep.mubr.bf16.mxu0 0
        %1193 = vmatmul.mubr.bf16.gmra.mrb[0].mxu0 %v1130
        %v1194 = vpop.f32.mrb[0].mxu0
        %v1195 = vadd.f32 %v1090, %v1194
        %v1196 = vpop.f32.mrb[0].mxu0
        %v1197 = vpop.f32.mrb[0].mxu0
        %v1198 = vadd.f32 %v1090, %v1197
        %v1199 = vpop.f32.mrb[0].mxu0
        %1200 = vdwg.mxu0
        %v1201 = vmax.f32 %v1171, 0.0
        %v1202 = vmax.f32 %v1174, 0.0
        %v1203 = vmax.f32 %v1179, 0.0
        %v1204 = vmax.f32 %v1182, 0.0
        %v1205 = vmax.f32 %v1187, 0.0
        %v1206 = vmax.f32 %v1190, 0.0
        %v1207 = vmax.f32 %v1195, 0.0
        %v1208 = vmax.f32 %v1198, 0.0
        %vm1209 = vcmask 261120
        %1210 = vst.msk [vmem:[#allocation3] sm:$0xff] %vm1209, 0.0
        %vm1211 = vcmask 254976
        %1212 = vst.msk [vmem:[#allocation3 + $0x8] sm:$0x3] %vm1211, 0.0
        %1213 = vst.msk [vmem:[#allocation3 + $0x10] sm:$0xff] %vm1209, 0.0
        %1214 = vst.msk [vmem:[#allocation3 + $0x18] sm:$0x3] %vm1211, 0.0
        %1215 = vst.msk [vmem:[#allocation3 + $0x20] sm:$0xff] %vm1209, 0.0
        %1216 = vst.msk [vmem:[#allocation3 + $0x28] sm:$0x3] %vm1211, 0.0
        %1217 = vst.msk [vmem:[#allocation3 + $0x30] sm:$0xff] %vm1209, 0.0
        %1218 = vst.msk [vmem:[#allocation3 + $0x38] sm:$0x3] %vm1211, 0.0
        %1219 = vst.msk [vmem:[#allocation3 + $0x40] sm:$0xff] %vm1209, 0.0
        %1220 = vst.msk [vmem:[#allocation3 + $0x48] sm:$0x3] %vm1211, 0.0
        %1221 = vst.msk [vmem:[#allocation3 + $0x50] sm:$0xff] %vm1209, 0.0
        %1222 = vst.msk [vmem:[#allocation3 + $0x58] sm:$0x3] %vm1211, 0.0
        %1223 = vst.msk [vmem:[#allocation3 + $0x60] sm:$0xff] %vm1209, 0.0
        %1224 = vst.msk [vmem:[#allocation3 + $0x68] sm:$0x3] %vm1211, 0.0
        %1225 = vst.msk [vmem:[#allocation3 + $0x70] sm:$0xff] %vm1209, 0.0
        %1226 = vst.msk [vmem:[#allocation3 + $0x78] sm:$0x3] %vm1211, 0.0
        %1227 = vst.msk [vmem:[#allocation3 + $0x80] sm:$0xff] %vm1209, 0.0
        %1228 = vst.msk [vmem:[#allocation3 + $0x88] sm:$0x3] %vm1211, 0.0
        %1229 = vst.msk [vmem:[#allocation3 + $0x90] sm:$0xff] %vm1209, 0.0
        %1230 = vst.msk [vmem:[#allocation3 + $0x98] sm:$0x3] %vm1211, 0.0
        %s1231 = scalar_lea.vmem [#allocation3], 16
        %vm1232 = vcmask 130048
        %1233 = vst.msk [vmem:[%s1231 + $0x1] sm:$0xff] %vm1232, %v1201
        %1234 = vst.msk [vmem:[%s1231 + $0x11] sm:$0xff] %vm1232, %v1202
        %1235 = vst.msk [vmem:[%s1231 + $0x21] sm:$0xff] %vm1232, %v1203
        %1236 = vst.msk [vmem:[%s1231 + $0x31] sm:$0xff] %vm1232, %v1204
        %1237 = vst.msk [vmem:[%s1231 + $0x41] sm:$0xff] %vm1232, %v1205
        %1238 = vst.msk [vmem:[%s1231 + $0x51] sm:$0xff] %vm1232, %v1206
        %1239 = vst.msk [vmem:[%s1231 + $0x61] sm:$0xff] %vm1232, %v1207
        %1240 = vst.msk [vmem:[%s1231 + $0x71] sm:$0xff] %vm1232, %v1208
        %v1241 = vld [vmem:[#allocation3] sm:$0xff]
        %v1242 = vld [vmem:[#allocation3 + $0x10] sm:$0xff]
        %v1243 = vld [vmem:[#allocation3 + $0x20] sm:$0xff]
        %v1244 = vld [vmem:[#allocation3 + $0x30] sm:$0xff]
        %v1245 = vld [vmem:[#allocation3 + $0x40] sm:$0xff]
        %v1246 = vld [vmem:[#allocation3 + $0x50] sm:$0xff]
        %v1247 = vld [vmem:[#allocation3 + $0x60] sm:$0xff]
        %v1248 = vld [vmem:[#allocation3 + $0x70] sm:$0xff]
        %v1249 = vpack.c.bf16 %v1242, %v1241
        %v1250 = vpack.c.bf16 %v1244, %v1243
        %v1251 = vpack.c.bf16 %v1246, %v1245
        %v1252 = vpack.c.bf16 %v1248, %v1247
        %1253 = vst.msk [vmem:[#allocation2] sm:$0xff] %vm1232, %v1249
        %1254 = vst.msk [vmem:[#allocation2 + $0x18] sm:$0xff] %vm1232, %v1250
        %1255 = vst.msk [vmem:[#allocation2 + $0x30] sm:$0xff] %vm1232, %v1251
        %1256 = vst.msk [vmem:[#allocation2 + $0x48] sm:$0xff] %vm1232, %v1252
        %v1257 = vld [vmem:[#allocation3 + $0x1] sm:$0xff]
        %v1258 = vld [vmem:[#allocation3 + $0x11] sm:$0xff]
        %v1259 = vld [vmem:[#allocation3 + $0x21] sm:$0xff]
        %v1260 = vld [vmem:[#allocation3 + $0x31] sm:$0xff]
        %v1261 = vld [vmem:[#allocation3 + $0x41] sm:$0xff]
        %v1262 = vld [vmem:[#allocation3 + $0x51] sm:$0xff]
        %v1263 = vld [vmem:[#allocation3 + $0x61] sm:$0xff]
        %v1264 = vld [vmem:[#allocation3 + $0x71] sm:$0xff]
        %v1265 = vpack.c.bf16 %v1258, %v1257
        %v1266 = vpack.c.bf16 %v1260, %v1259
        %v1267 = vpack.c.bf16 %v1262, %v1261
        %v1268 = vpack.c.bf16 %v1264, %v1263
        %1273 = vrot.lane.b32.xlu0 %v1265, 16
        %v1274 = vpop.permute.xlu0 %1273
        %1275 = vrot.lane.b32.xlu0 %v1266, 16
        %v1276 = vpop.permute.xlu0 %1275
        %1277 = vrot.lane.b32.xlu0 %v1267, 16
        %v1278 = vpop.permute.xlu0 %1277
        %1279 = vrot.lane.b32.xlu0 %v1268, 16
        %v1280 = vpop.permute.xlu0 %1279
        %vm1285 = vcmask 261248
        %1286 = vst.msk [vmem:[#allocation2] sm:$0xff] %vm1285, %v1274
        %1287 = vst.msk [vmem:[#allocation2 + $0x18] sm:$0xff] %vm1285, %v1276
        %1288 = vst.msk [vmem:[#allocation2 + $0x30] sm:$0xff] %vm1285, %v1278
        %1289 = vst.msk [vmem:[#allocation2 + $0x48] sm:$0xff] %vm1285, %v1280
        %v1290 = vld [vmem:[#allocation3 + $0x2] sm:$0xff]
        %v1291 = vld [vmem:[#allocation3 + $0x12] sm:$0xff]
        %v1292 = vld [vmem:[#allocation3 + $0x22] sm:$0xff]
        %v1293 = vld [vmem:[#allocation3 + $0x32] sm:$0xff]
        %v1294 = vld [vmem:[#allocation3 + $0x42] sm:$0xff]
        %v1295 = vld [vmem:[#allocation3 + $0x52] sm:$0xff]
        %v1296 = vld [vmem:[#allocation3 + $0x62] sm:$0xff]
        %v1297 = vld [vmem:[#allocation3 + $0x72] sm:$0xff]
        %v1298 = vpack.c.bf16 %v1291, %v1290
        %v1299 = vpack.c.bf16 %v1293, %v1292
        %v1300 = vpack.c.bf16 %v1295, %v1294
        %v1301 = vpack.c.bf16 %v1297, %v1296
        %1306 = vrot.lane.b32.xlu0 %v1298, 32
        %v1307 = vpop.permute.xlu0 %1306
        %1308 = vrot.lane.b32.xlu0 %v1299, 32
        %v1309 = vpop.permute.xlu0 %1308
        %1310 = vrot.lane.b32.xlu0 %v1300, 32
        %v1311 = vpop.permute.xlu0 %1310
        %1312 = vrot.lane.b32.xlu0 %v1301, 32
        %v1313 = vpop.permute.xlu0 %1312
        %vm1318 = vcmask 392448
        %1319 = vst.msk [vmem:[#allocation2] sm:$0xff] %vm1318, %v1307
        %1320 = vst.msk [vmem:[#allocation2 + $0x18] sm:$0xff] %vm1318, %v1309
        %1321 = vst.msk [vmem:[#allocation2 + $0x30] sm:$0xff] %vm1318, %v1311
        %1322 = vst.msk [vmem:[#allocation2 + $0x48] sm:$0xff] %vm1318, %v1313
        %v1323 = vld [vmem:[%s1231] sm:$0xff]
        %v1324 = vld [vmem:[%s1231 + $0x10] sm:$0xff]
        %v1325 = vld [vmem:[%s1231 + $0x20] sm:$0xff]
        %v1326 = vld [vmem:[%s1231 + $0x30] sm:$0xff]
        %v1327 = vld [vmem:[%s1231 + $0x40] sm:$0xff]
        %v1328 = vld [vmem:[%s1231 + $0x50] sm:$0xff]
        %v1329 = vld [vmem:[%s1231 + $0x60] sm:$0xff]
        %v1330 = vld [vmem:[%s1231 + $0x70] sm:$0xff]
        %v1331 = vpack.c.bf16 %v1324, %v1323
        %v1332 = vpack.c.bf16 %v1326, %v1325
        %v1333 = vpack.c.bf16 %v1328, %v1327
        %v1334 = vpack.c.bf16 %v1330, %v1329
        %1339 = vrot.lane.b32.xlu0 %v1331, 48
        %v1340 = vpop.permute.xlu0 %1339
        %1341 = vrot.lane.b32.xlu0 %v1332, 48
        %v1342 = vpop.permute.xlu0 %1341
        %1343 = vrot.lane.b32.xlu0 %v1333, 48
        %v1344 = vpop.permute.xlu0 %1343
        %1345 = vrot.lane.b32.xlu0 %v1334, 48
        %v1346 = vpop.permute.xlu0 %1345
        %vm1351 = vcmask 523648
        %1352 = vst.msk [vmem:[#allocation2] sm:$0xff] %vm1351, %v1340
        %1353 = vst.msk [vmem:[#allocation2 + $0x18] sm:$0xff] %vm1351, %v1342
        %1354 = vst.msk [vmem:[#allocation2 + $0x30] sm:$0xff] %vm1351, %v1344
        %1355 = vst.msk [vmem:[#allocation2 + $0x48] sm:$0xff] %vm1351, %v1346
        %v1356 = vld [vmem:[%s1231 + $0x1] sm:$0xff]
        %v1357 = vld [vmem:[%s1231 + $0x11] sm:$0xff]
        %v1358 = vld [vmem:[%s1231 + $0x21] sm:$0xff]
        %v1359 = vld [vmem:[%s1231 + $0x31] sm:$0xff]
        %v1360 = vld [vmem:[%s1231 + $0x41] sm:$0xff]
        %v1361 = vld [vmem:[%s1231 + $0x51] sm:$0xff]
        %v1362 = vld [vmem:[%s1231 + $0x61] sm:$0xff]
        %v1363 = vld [vmem:[%s1231 + $0x71] sm:$0xff]
        %v1364 = vpack.c.bf16 %v1357, %v1356
        %v1365 = vpack.c.bf16 %v1359, %v1358
        %v1366 = vpack.c.bf16 %v1361, %v1360
        %v1367 = vpack.c.bf16 %v1363, %v1362
        %1372 = vrot.lane.b32.xlu0 %v1364, 64
        %v1373 = vpop.permute.xlu0 %1372
        %1374 = vrot.lane.b32.xlu0 %v1365, 64
        %v1375 = vpop.permute.xlu0 %1374
        %1376 = vrot.lane.b32.xlu0 %v1366, 64
        %v1377 = vpop.permute.xlu0 %1376
        %1378 = vrot.lane.b32.xlu0 %v1367, 64
        %v1379 = vpop.permute.xlu0 %1378
        %vm1384 = vcmask 654848
        %1385 = vst.msk [vmem:[#allocation2] sm:$0xff] %vm1384, %v1373
        %1386 = vst.msk [vmem:[#allocation2 + $0x18] sm:$0xff] %vm1384, %v1375
        %1387 = vst.msk [vmem:[#allocation2 + $0x30] sm:$0xff] %vm1384, %v1377
        %1388 = vst.msk [vmem:[#allocation2 + $0x48] sm:$0xff] %vm1384, %v1379
        %v1389 = vld [vmem:[%s1231 + $0x2] sm:$0xff]
        %v1390 = vld [vmem:[%s1231 + $0x12] sm:$0xff]
        %v1391 = vld [vmem:[%s1231 + $0x22] sm:$0xff]
        %v1392 = vld [vmem:[%s1231 + $0x32] sm:$0xff]
        %v1393 = vld [vmem:[%s1231 + $0x42] sm:$0xff]
        %v1394 = vld [vmem:[%s1231 + $0x52] sm:$0xff]
        %v1395 = vld [vmem:[%s1231 + $0x62] sm:$0xff]
        %v1396 = vld [vmem:[%s1231 + $0x72] sm:$0xff]
        %v1397 = vpack.c.bf16 %v1390, %v1389
        %v1398 = vpack.c.bf16 %v1392, %v1391
        %v1399 = vpack.c.bf16 %v1394, %v1393
        %v1400 = vpack.c.bf16 %v1396, %v1395
        %1405 = vrot.lane.b32.xlu0 %v1397, 80
        %v1406 = vpop.permute.xlu0 %1405
        %1407 = vrot.lane.b32.xlu0 %v1398, 80
        %v1408 = vpop.permute.xlu0 %1407
        %1409 = vrot.lane.b32.xlu0 %v1399, 80
        %v1410 = vpop.permute.xlu0 %1409
        %1411 = vrot.lane.b32.xlu0 %v1400, 80
        %v1412 = vpop.permute.xlu0 %1411
        %vm1417 = vcmask 786048
        %1418 = vst.msk [vmem:[#allocation2] sm:$0xff] %vm1417, %v1406
        %1419 = vst.msk [vmem:[#allocation2 + $0x18] sm:$0xff] %vm1417, %v1408
        %1420 = vst.msk [vmem:[#allocation2 + $0x30] sm:$0xff] %vm1417, %v1410
        %1421 = vst.msk [vmem:[#allocation2 + $0x48] sm:$0xff] %vm1417, %v1412
        %s1422 = scalar_lea.vmem [#allocation3], 32
        %v1423 = vld [vmem:[%s1422] sm:$0xff]
        %v1424 = vld [vmem:[%s1422 + $0x10] sm:$0xff]
        %v1425 = vld [vmem:[%s1422 + $0x20] sm:$0xff]
        %v1426 = vld [vmem:[%s1422 + $0x30] sm:$0xff]
        %v1427 = vld [vmem:[%s1422 + $0x40] sm:$0xff]
        %v1428 = vld [vmem:[%s1422 + $0x50] sm:$0xff]
        %v1429 = vld [vmem:[%s1422 + $0x60] sm:$0xff]
        %v1430 = vld [vmem:[%s1422 + $0x70] sm:$0xff]
        %v1431 = vpack.c.bf16 %v1424, %v1423
        %v1432 = vpack.c.bf16 %v1426, %v1425
        %v1433 = vpack.c.bf16 %v1428, %v1427
        %v1434 = vpack.c.bf16 %v1430, %v1429
        %1439 = vrot.lane.b32.xlu0 %v1431, 96
        %v1440 = vpop.permute.xlu0 %1439
        %1441 = vrot.lane.b32.xlu0 %v1432, 96
        %v1442 = vpop.permute.xlu0 %1441
        %1443 = vrot.lane.b32.xlu0 %v1433, 96
        %v1444 = vpop.permute.xlu0 %1443
        %1445 = vrot.lane.b32.xlu0 %v1434, 96
        %v1446 = vpop.permute.xlu0 %1445
        %vm1451 = vcmask 917248
        %1452 = vst.msk [vmem:[#allocation2] sm:$0xff] %vm1451, %v1440
        %1453 = vst.msk [vmem:[#allocation2 + $0x18] sm:$0xff] %vm1451, %v1442
        %1454 = vst.msk [vmem:[#allocation2 + $0x30] sm:$0xff] %vm1451, %v1444
        %1455 = vst.msk [vmem:[#allocation2 + $0x48] sm:$0xff] %vm1451, %v1446
        %v1456 = vld [vmem:[%s1422 + $0x1] sm:$0xff]
        %v1457 = vld [vmem:[%s1422 + $0x11] sm:$0xff]
        %v1458 = vld [vmem:[%s1422 + $0x21] sm:$0xff]
        %v1459 = vld [vmem:[%s1422 + $0x31] sm:$0xff]
        %v1460 = vld [vmem:[%s1422 + $0x41] sm:$0xff]
        %v1461 = vld [vmem:[%s1422 + $0x51] sm:$0xff]
        %v1462 = vld [vmem:[%s1422 + $0x61] sm:$0xff]
        %v1463 = vld [vmem:[%s1422 + $0x71] sm:$0xff]
        %v1464 = vpack.c.bf16 %v1457, %v1456
        %v1465 = vpack.c.bf16 %v1459, %v1458
        %v1466 = vpack.c.bf16 %v1461, %v1460
        %v1467 = vpack.c.bf16 %v1463, %v1462
        %1472 = vrot.lane.b32.xlu0 %v1464, 112
        %v1473 = vpop.permute.xlu0 %1472
        %1474 = vrot.lane.b32.xlu0 %v1465, 112
        %v1475 = vpop.permute.xlu0 %1474
        %1476 = vrot.lane.b32.xlu0 %v1466, 112
        %v1477 = vpop.permute.xlu0 %1476
        %1478 = vrot.lane.b32.xlu0 %v1467, 112
        %v1479 = vpop.permute.xlu0 %1478
        %vm1484 = vcmask 1048448
        %1485 = vst.msk [vmem:[#allocation2] sm:$0xff] %vm1484, %v1473
        %1486 = vst.msk [vmem:[#allocation2 + $0x18] sm:$0xff] %vm1484, %v1475
        %1487 = vst.msk [vmem:[#allocation2 + $0x30] sm:$0xff] %vm1484, %v1477
        %1488 = vst.msk [vmem:[#allocation2 + $0x48] sm:$0xff] %vm1484, %v1479
        %v1489 = vld [vmem:[%s1422 + $0x2] sm:$0xff]
        %v1490 = vld [vmem:[%s1422 + $0x12] sm:$0xff]
        %v1491 = vld [vmem:[%s1422 + $0x22] sm:$0xff]
        %v1492 = vld [vmem:[%s1422 + $0x32] sm:$0xff]
        %v1493 = vld [vmem:[%s1422 + $0x42] sm:$0xff]
        %v1494 = vld [vmem:[%s1422 + $0x52] sm:$0xff]
        %v1495 = vld [vmem:[%s1422 + $0x62] sm:$0xff]
        %v1496 = vld [vmem:[%s1422 + $0x72] sm:$0xff]
        %v1497 = vpack.c.bf16 %v1490, %v1489
        %v1498 = vpack.c.bf16 %v1492, %v1491
        %v1499 = vpack.c.bf16 %v1494, %v1493
        %v1500 = vpack.c.bf16 %v1496, %v1495
        %1501 = vst.msk [vmem:[#allocation2 + $0x8] sm:$0xff] %vm1232, %v1497
        %1502 = vst.msk [vmem:[#allocation2 + $0x20] sm:$0xff] %vm1232, %v1498
        %1503 = vst.msk [vmem:[#allocation2 + $0x38] sm:$0xff] %vm1232, %v1499
        %1504 = vst.msk [vmem:[#allocation2 + $0x50] sm:$0xff] %vm1232, %v1500
        %v1505 = vld [vmem:[#allocation2] sm:$0xff]
        %v1506 = vld [vmem:[#allocation2 + $0x8] sm:$0xff]
        %v1507 = vld [vmem:[#allocation2 + $0x18] sm:$0xff]
        %v1508 = vld [vmem:[#allocation2 + $0x20] sm:$0xff]
        %v1509 = vld [vmem:[#allocation2 + $0x30] sm:$0xff]
        %v1510 = vld [vmem:[#allocation2 + $0x38] sm:$0xff]
        %v1511 = vld [vmem:[#allocation2 + $0x48] sm:$0xff]
        %v1512 = vld [vmem:[#allocation2 + $0x50] sm:$0xff]
        %v1513 = vld [vmem:[%s3] sm:$0xf]
        %v1514 = vld [vmem:[%s3 + $0x4] sm:$0xf]
        %v1515 = vld [vmem:[%s3 + $0x8] sm:$0xf]
        %v1516 = vld [vmem:[%s3 + $0xc] sm:$0xf]
        %v1517 = vld [vmem:[%s3 + $0x10] sm:$0xf]
        %v1518 = vld [vmem:[%s3 + $0x14] sm:$0xf]
        %v1519 = vld [vmem:[%s3 + $0x18] sm:$0xf]
        %v1520 = vld [vmem:[%s3 + $0x1c] sm:$0xf]
        %v1521 = vld [vmem:[%s3 + $0x20] sm:$0xf]
        %v1522 = vld [vmem:[%s3 + $0x24] sm:$0xf]
        %v1523 = vld [vmem:[%s3 + $0x28] sm:$0xf]
        %v1524 = vld [vmem:[%s3 + $0x2c] sm:$0xf]
        %v1525 = vld [vmem:[%s3 + $0x30] sm:$0xf]
        %v1526 = vld [vmem:[%s3 + $0x34] sm:$0xf]
        %v1527 = vld [vmem:[%s3 + $0x38] sm:$0xf]
        %v1528 = vld [vmem:[%s3 + $0x3c] sm:$0xf]
        %v1529 = vld [vmem:[%s3 + $0x40] sm:$0xf]
        %v1530 = vld [vmem:[%s3 + $0x44] sm:$0xf]
        %v1531 = vld [vmem:[%s4] sm:$0x1]
        %v1533 = vlaneseq
        %v1534 = vshrl.u32 %v1533, 7
        %v1535 = vsub.s32 0, %v1534
        %v1536 = vrot.slane %v1531, %v1535
        %v1556 = vunpack.c.l.b16 %v1513
        %v1557 = vunpack.c.l.b16 %v1514
        %v1558 = vunpack.c.l.b16 %v1515
        %v1559 = vunpack.c.l.b16 %v1516
        %v1560 = vunpack.c.l.b16 %v1517
        %v1561 = vunpack.c.l.b16 %v1518
        %v1562 = vunpack.c.l.b16 %v1519
        %v1563 = vunpack.c.l.b16 %v1520
        %v1564 = vunpack.c.l.b16 %v1521
        %v1565 = vunpack.c.l.b16 %v1522
        %v1566 = vunpack.c.l.b16 %v1523
        %v1567 = vunpack.c.l.b16 %v1524
        %v1568 = vunpack.c.l.b16 %v1525
        %v1569 = vunpack.c.l.b16 %v1526
        %v1570 = vunpack.c.l.b16 %v1527
        %v1571 = vunpack.c.l.b16 %v1528
        %v1572 = vunpack.c.l.b16 %v1529
        %v1573 = vunpack.c.l.b16 %v1530
        %v1574 = vpack.c.b16 %v1557, %v1556
        %v1575 = vpack.c.b16 %v1559, %v1558
        %v1576 = vpack.c.b16 %v1561, %v1560
        %v1577 = vpack.c.b16 %v1563, %v1562
        %v1578 = vpack.c.b16 %v1565, %v1564
        %v1579 = vpack.c.b16 %v1567, %v1566
        %v1580 = vpack.c.b16 %v1569, %v1568
        %v1581 = vpack.c.b16 %v1571, %v1570
        %v1582 = vpack.c.b16 %v1573, %v1572
        %v1593 = vsel %vm1232, %v1506, 0
        %v1596 = vsel %vm1232, %v1508, 0
        %v1599 = vsel %vm1232, %v1510, 0
        %v1602 = vsel %vm1232, %v1512, 0
        %1604 = vmatprep.subr.bf16.mxu0 0
        %1605 = vmatpush1.bf16.msra.mxu0 %v1574
        %1606 = vmatprep.subr.bf16.mxu0 0
        %1607 = vmatpush1.bf16.msra.mxu0 %v1575
        %1608 = vmatprep.subr.bf16.mxu0 0
        %1609 = vmatpush1.bf16.msra.mxu0 %v1576
        %1610 = vmatprep.subr.bf16.mxu0 0
        %1611 = vmatpush1.bf16.msra.mxu0 %v1577
        %1612 = vmatprep.subr.bf16.mxu0 0
        %1613 = vmatpush1.bf16.msra.mxu0 %v1578
        %1614 = vmatprep.subr.bf16.mxu0 0
        %1615 = vmatpush1.bf16.msra.mxu0 %v1579
        %1616 = vmatprep.subr.bf16.mxu0 0
        %1617 = vmatpush1.bf16.msra.mxu0 %v1580
        %1618 = vmatprep.subr.bf16.mxu0 0
        %1619 = vmatpush1.bf16.msra.mxu0 %v1581
        %1620 = vmatprep.subr.bf16.mxu0 0
        %1621 = vmatpush1.bf16.msra.mxu0 %v1582
        %1622 = vmatprep.subr.bf16.mxu0 0
        %1623 = vmatpush1.bf16.msra.mxu0 0
        %1624 = vmatprep.subr.bf16.mxu0 0
        %1625 = vmatpush1.bf16.msra.mxu0 0
        %1626 = vmatprep.subr.bf16.mxu0 0
        %1627 = vmatpush1.bf16.msra.mxu0 0
        %1628 = vmatprep.subr.bf16.mxu0 0
        %1629 = vmatpush1.bf16.msra.mxu0 0
        %1630 = vmatprep.subr.bf16.mxu0 0
        %1631 = vmatpush1.bf16.msra.mxu0 0
        %1632 = vmatprep.subr.bf16.mxu0 0
        %1633 = vmatpush1.bf16.msra.mxu0 0
        %1634 = vmatprep.subr.bf16.mxu0 0
        %1635 = vmatpush1.bf16.msra.mxu0 0
        %1636 = vmatprep.mubr.bf16.mxu0 %v1593
        %1637 = vmatmul.mubr.bf16.gmra.mrb[0].mxu0 %v1505
        %v1638 = vpop.f32.mrb[0].mxu0
        %v1639 = vadd.f32 %v1536, %v1638
        %v1640 = vpop.f32.mrb[0].mxu0
        %v1641 = vpop.f32.mrb[0].mxu0
        %v1642 = vadd.f32 %v1536, %v1641
        %v1643 = vpop.f32.mrb[0].mxu0
        %1644 = vmatprep.mubr.bf16.mxu0 %v1596
        %1645 = vmatmul.mubr.bf16.gmra.mrb[0].mxu0 %v1507
        %v1646 = vpop.f32.mrb[0].mxu0
        %v1647 = vadd.f32 %v1536, %v1646
        %v1648 = vpop.f32.mrb[0].mxu0
        %v1649 = vpop.f32.mrb[0].mxu0
        %v1650 = vadd.f32 %v1536, %v1649
        %v1651 = vpop.f32.mrb[0].mxu0
        %1652 = vmatprep.mubr.bf16.mxu0 %v1599
        %1653 = vmatmul.mubr.bf16.gmra.mrb[0].mxu0 %v1509
        %v1654 = vpop.f32.mrb[0].mxu0
        %v1655 = vadd.f32 %v1536, %v1654
        %v1656 = vpop.f32.mrb[0].mxu0
        %v1657 = vpop.f32.mrb[0].mxu0
        %v1658 = vadd.f32 %v1536, %v1657
        %v1659 = vpop.f32.mrb[0].mxu0
        %1660 = vmatprep.mubr.bf16.mxu0 %v1602
        %1661 = vmatmul.mubr.bf16.gmra.mrb[0].mxu0 %v1511
        %v1662 = vpop.f32.mrb[0].mxu0
        %v1663 = vadd.f32 %v1536, %v1662
        %v1664 = vpop.f32.mrb[0].mxu0
        %v1665 = vpop.f32.mrb[0].mxu0
        %v1666 = vadd.f32 %v1536, %v1665
        %v1667 = vpop.f32.mrb[0].mxu0
        %1668 = vdwg.mxu0
        %v1669 = vmax.f32 %v1639, 0.0
        %v1670 = vmax.f32 %v1642, 0.0
        %v1671 = vmax.f32 %v1647, 0.0
        %v1672 = vmax.f32 %v1650, 0.0
        %v1673 = vmax.f32 %v1655, 0.0
        %v1674 = vmax.f32 %v1658, 0.0
        %v1675 = vmax.f32 %v1663, 0.0
        %v1676 = vmax.f32 %v1666, 0.0
        %1677 = vst.msk [vmem:[#allocation3] sm:$0xff] %vm1209, 0.0
        %1678 = vst.msk [vmem:[#allocation3 + $0x8] sm:$0x3] %vm1211, 0.0
        %1679 = vst.msk [vmem:[#allocation3 + $0x10] sm:$0xff] %vm1209, 0.0
        %1680 = vst.msk [vmem:[#allocation3 + $0x18] sm:$0x3] %vm1211, 0.0
        %1681 = vst.msk [vmem:[#allocation3 + $0x20] sm:$0xff] %vm1209, 0.0
        %1682 = vst.msk [vmem:[#allocation3 + $0x28] sm:$0x3] %vm1211, 0.0
        %1683 = vst.msk [vmem:[#allocation3 + $0x30] sm:$0xff] %vm1209, 0.0
        %1684 = vst.msk [vmem:[#allocation3 + $0x38] sm:$0x3] %vm1211, 0.0
        %1685 = vst.msk [vmem:[#allocation3 + $0x40] sm:$0xff] %vm1209, 0.0
        %1686 = vst.msk [vmem:[#allocation3 + $0x48] sm:$0x3] %vm1211, 0.0
        %1687 = vst.msk [vmem:[#allocation3 + $0x50] sm:$0xff] %vm1209, 0.0
        %1688 = vst.msk [vmem:[#allocation3 + $0x58] sm:$0x3] %vm1211, 0.0
        %1689 = vst.msk [vmem:[#allocation3 + $0x60] sm:$0xff] %vm1209, 0.0
        %1690 = vst.msk [vmem:[#allocation3 + $0x68] sm:$0x3] %vm1211, 0.0
        %1691 = vst.msk [vmem:[#allocation3 + $0x70] sm:$0xff] %vm1209, 0.0
        %1692 = vst.msk [vmem:[#allocation3 + $0x78] sm:$0x3] %vm1211, 0.0
        %1693 = vst.msk [vmem:[#allocation3 + $0x80] sm:$0xff] %vm1209, 0.0
        %1694 = vst.msk [vmem:[#allocation3 + $0x88] sm:$0x3] %vm1211, 0.0
        %1695 = vst.msk [vmem:[#allocation3 + $0x90] sm:$0xff] %vm1209, 0.0
        %1696 = vst.msk [vmem:[#allocation3 + $0x98] sm:$0x3] %vm1211, 0.0
        %1697 = vst.msk [vmem:[%s1231 + $0x1] sm:$0xff] %vm1209, %v1669
        %1698 = vst.msk [vmem:[%s1231 + $0x11] sm:$0xff] %vm1209, %v1670
        %1699 = vst.msk [vmem:[%s1231 + $0x21] sm:$0xff] %vm1209, %v1671
        %1700 = vst.msk [vmem:[%s1231 + $0x31] sm:$0xff] %vm1209, %v1672
        %1701 = vst.msk [vmem:[%s1231 + $0x41] sm:$0xff] %vm1209, %v1673
        %1702 = vst.msk [vmem:[%s1231 + $0x51] sm:$0xff] %vm1209, %v1674
        %1703 = vst.msk [vmem:[%s1231 + $0x61] sm:$0xff] %vm1209, %v1675
        %1704 = vst.msk [vmem:[%s1231 + $0x71] sm:$0xff] %vm1209, %v1676
        %v1705 = vld [vmem:[#allocation3] sm:$0xff]
        %v1706 = vld [vmem:[#allocation3 + $0x10] sm:$0xff]
        %v1707 = vld [vmem:[#allocation3 + $0x20] sm:$0xff]
        %v1708 = vld [vmem:[#allocation3 + $0x30] sm:$0xff]
        %v1709 = vld [vmem:[#allocation3 + $0x40] sm:$0xff]
        %v1710 = vld [vmem:[#allocation3 + $0x50] sm:$0xff]
        %v1711 = vld [vmem:[#allocation3 + $0x60] sm:$0xff]
        %v1712 = vld [vmem:[#allocation3 + $0x70] sm:$0xff]
        %v1713 = vpack.c.bf16 %v1706, %v1705
        %v1714 = vpack.c.bf16 %v1708, %v1707
        %v1715 = vpack.c.bf16 %v1710, %v1709
        %v1716 = vpack.c.bf16 %v1712, %v1711
        %1717 = vst.msk [vmem:[#allocation2] sm:$0xff] %vm1209, %v1713
        %1718 = vst.msk [vmem:[#allocation2 + $0x18] sm:$0xff] %vm1209, %v1714
        %1719 = vst.msk [vmem:[#allocation2 + $0x30] sm:$0xff] %vm1209, %v1715
        %1720 = vst.msk [vmem:[#allocation2 + $0x48] sm:$0xff] %vm1209, %v1716
        %v1721 = vld [vmem:[#allocation3 + $0x1] sm:$0xff]
        %v1722 = vld [vmem:[#allocation3 + $0x11] sm:$0xff]
        %v1723 = vld [vmem:[#allocation3 + $0x21] sm:$0xff]
        %v1724 = vld [vmem:[#allocation3 + $0x31] sm:$0xff]
        %v1725 = vld [vmem:[#allocation3 + $0x41] sm:$0xff]
        %v1726 = vld [vmem:[#allocation3 + $0x51] sm:$0xff]
        %v1727 = vld [vmem:[#allocation3 + $0x61] sm:$0xff]
        %v1728 = vld [vmem:[#allocation3 + $0x71] sm:$0xff]
        %v1729 = vpack.c.bf16 %v1722, %v1721
        %v1730 = vpack.c.bf16 %v1724, %v1723
        %v1731 = vpack.c.bf16 %v1726, %v1725
        %v1732 = vpack.c.bf16 %v1728, %v1727
        %1737 = vrot.lane.b32.xlu0 %v1729, 32
        %v1738 = vpop.permute.xlu0 %1737
        %1739 = vrot.lane.b32.xlu0 %v1730, 32
        %v1740 = vpop.permute.xlu0 %1739
        %1741 = vrot.lane.b32.xlu0 %v1731, 32
        %v1742 = vpop.permute.xlu0 %1741
        %1743 = vrot.lane.b32.xlu0 %v1732, 32
        %v1744 = vpop.permute.xlu0 %1743
        %vm1749 = vcmask 523520
        %1750 = vst.msk [vmem:[#allocation2] sm:$0xff] %vm1749, %v1738
        %1751 = vst.msk [vmem:[#allocation2 + $0x18] sm:$0xff] %vm1749, %v1740
        %1752 = vst.msk [vmem:[#allocation2 + $0x30] sm:$0xff] %vm1749, %v1742
        %1753 = vst.msk [vmem:[#allocation2 + $0x48] sm:$0xff] %vm1749, %v1744
        %v1754 = vld [vmem:[#allocation3 + $0x2] sm:$0xff]
        %v1755 = vld [vmem:[#allocation3 + $0x12] sm:$0xff]
        %v1756 = vld [vmem:[#allocation3 + $0x22] sm:$0xff]
        %v1757 = vld [vmem:[#allocation3 + $0x32] sm:$0xff]
        %v1758 = vld [vmem:[#allocation3 + $0x42] sm:$0xff]
        %v1759 = vld [vmem:[#allocation3 + $0x52] sm:$0xff]
        %v1760 = vld [vmem:[#allocation3 + $0x62] sm:$0xff]
        %v1761 = vld [vmem:[#allocation3 + $0x72] sm:$0xff]
        %v1762 = vpack.c.bf16 %v1755, %v1754
        %v1763 = vpack.c.bf16 %v1757, %v1756
        %v1764 = vpack.c.bf16 %v1759, %v1758
        %v1765 = vpack.c.bf16 %v1761, %v1760
        %1770 = vrot.lane.b32.xlu0 %v1762, 64
        %v1771 = vpop.permute.xlu0 %1770
        %1772 = vrot.lane.b32.xlu0 %v1763, 64
        %v1773 = vpop.permute.xlu0 %1772
        %1774 = vrot.lane.b32.xlu0 %v1764, 64
        %v1775 = vpop.permute.xlu0 %1774
        %1776 = vrot.lane.b32.xlu0 %v1765, 64
        %v1777 = vpop.permute.xlu0 %1776
        %vm1782 = vcmask 785920
        %1783 = vst.msk [vmem:[#allocation2] sm:$0xff] %vm1782, %v1771
        %1784 = vst.msk [vmem:[#allocation2 + $0x18] sm:$0xff] %vm1782, %v1773
        %1785 = vst.msk [vmem:[#allocation2 + $0x30] sm:$0xff] %vm1782, %v1775
        %1786 = vst.msk [vmem:[#allocation2 + $0x48] sm:$0xff] %vm1782, %v1777
        %v1787 = vld [vmem:[%s1231] sm:$0xff]
        %v1788 = vld [vmem:[%s1231 + $0x10] sm:$0xff]
        %v1789 = vld [vmem:[%s1231 + $0x20] sm:$0xff]
        %v1790 = vld [vmem:[%s1231 + $0x30] sm:$0xff]
        %v1791 = vld [vmem:[%s1231 + $0x40] sm:$0xff]
        %v1792 = vld [vmem:[%s1231 + $0x50] sm:$0xff]
        %v1793 = vld [vmem:[%s1231 + $0x60] sm:$0xff]
        %v1794 = vld [vmem:[%s1231 + $0x70] sm:$0xff]
        %v1795 = vpack.c.bf16 %v1788, %v1787
        %v1796 = vpack.c.bf16 %v1790, %v1789
        %v1797 = vpack.c.bf16 %v1792, %v1791
        %v1798 = vpack.c.bf16 %v1794, %v1793
        %1803 = vrot.lane.b32.xlu0 %v1795, 96
        %v1804 = vpop.permute.xlu0 %1803
        %1805 = vrot.lane.b32.xlu0 %v1796, 96
        %v1806 = vpop.permute.xlu0 %1805
        %1807 = vrot.lane.b32.xlu0 %v1797, 96
        %v1808 = vpop.permute.xlu0 %1807
        %1809 = vrot.lane.b32.xlu0 %v1798, 96
        %v1810 = vpop.permute.xlu0 %1809
        %vm1815 = vcmask 1048320
        %1816 = vst.msk [vmem:[#allocation2] sm:$0xff] %vm1815, %v1804
        %1817 = vst.msk [vmem:[#allocation2 + $0x18] sm:$0xff] %vm1815, %v1806
        %1818 = vst.msk [vmem:[#allocation2 + $0x30] sm:$0xff] %vm1815, %v1808
        %1819 = vst.msk [vmem:[#allocation2 + $0x48] sm:$0xff] %vm1815, %v1810
        %v1820 = vld [vmem:[%s1231 + $0x1] sm:$0xff]
        %v1821 = vld [vmem:[%s1231 + $0x11] sm:$0xff]
        %v1822 = vld [vmem:[%s1231 + $0x21] sm:$0xff]
        %v1823 = vld [vmem:[%s1231 + $0x31] sm:$0xff]
        %v1824 = vld [vmem:[%s1231 + $0x41] sm:$0xff]
        %v1825 = vld [vmem:[%s1231 + $0x51] sm:$0xff]
        %v1826 = vld [vmem:[%s1231 + $0x61] sm:$0xff]
        %v1827 = vld [vmem:[%s1231 + $0x71] sm:$0xff]
        %v1828 = vpack.c.bf16 %v1821, %v1820
        %v1829 = vpack.c.bf16 %v1823, %v1822
        %v1830 = vpack.c.bf16 %v1825, %v1824
        %v1831 = vpack.c.bf16 %v1827, %v1826
        %1832 = vst.msk [vmem:[#allocation2 + $0x8] sm:$0xff] %vm1209, %v1828
        %1833 = vst.msk [vmem:[#allocation2 + $0x20] sm:$0xff] %vm1209, %v1829
        %1834 = vst.msk [vmem:[#allocation2 + $0x38] sm:$0xff] %vm1209, %v1830
        %1835 = vst.msk [vmem:[#allocation2 + $0x50] sm:$0xff] %vm1209, %v1831
        %v1836 = vld [vmem:[%s1231 + $0x2] sm:$0xff]
        %v1837 = vld [vmem:[%s1231 + $0x12] sm:$0xff]
        %v1838 = vld [vmem:[%s1231 + $0x22] sm:$0xff]
        %v1839 = vld [vmem:[%s1231 + $0x32] sm:$0xff]
        %v1840 = vld [vmem:[%s1231 + $0x42] sm:$0xff]
        %v1841 = vld [vmem:[%s1231 + $0x52] sm:$0xff]
        %v1842 = vld [vmem:[%s1231 + $0x62] sm:$0xff]
        %v1843 = vld [vmem:[%s1231 + $0x72] sm:$0xff]
        %v1844 = vpack.c.bf16 %v1837, %v1836
        %v1845 = vpack.c.bf16 %v1839, %v1838
        %v1846 = vpack.c.bf16 %v1841, %v1840
        %v1847 = vpack.c.bf16 %v1843, %v1842
        %1852 = vrot.lane.b32.xlu0 %v1844, 32
        %v1853 = vpop.permute.xlu0 %1852
        %1854 = vrot.lane.b32.xlu0 %v1845, 32
        %v1855 = vpop.permute.xlu0 %1854
        %1856 = vrot.lane.b32.xlu0 %v1846, 32
        %v1857 = vpop.permute.xlu0 %1856
        %1858 = vrot.lane.b32.xlu0 %v1847, 32
        %v1859 = vpop.permute.xlu0 %1858
        %1864 = vst.msk [vmem:[#allocation2 + $0x8] sm:$0xff] %vm1749, %v1853
        %1865 = vst.msk [vmem:[#allocation2 + $0x20] sm:$0xff] %vm1749, %v1855
        %1866 = vst.msk [vmem:[#allocation2 + $0x38] sm:$0xff] %vm1749, %v1857
        %1867 = vst.msk [vmem:[#allocation2 + $0x50] sm:$0xff] %vm1749, %v1859
        %v1868 = vld [vmem:[%s1422] sm:$0xff]
        %v1869 = vld [vmem:[%s1422 + $0x10] sm:$0xff]
        %v1870 = vld [vmem:[%s1422 + $0x20] sm:$0xff]
        %v1871 = vld [vmem:[%s1422 + $0x30] sm:$0xff]
        %v1872 = vld [vmem:[%s1422 + $0x40] sm:$0xff]
        %v1873 = vld [vmem:[%s1422 + $0x50] sm:$0xff]
        %v1874 = vld [vmem:[%s1422 + $0x60] sm:$0xff]
        %v1875 = vld [vmem:[%s1422 + $0x70] sm:$0xff]
        %v1876 = vpack.c.bf16 %v1869, %v1868
        %v1877 = vpack.c.bf16 %v1871, %v1870
        %v1878 = vpack.c.bf16 %v1873, %v1872
        %v1879 = vpack.c.bf16 %v1875, %v1874
        %1884 = vrot.lane.b32.xlu0 %v1876, 64
        %v1885 = vpop.permute.xlu0 %1884
        %1886 = vrot.lane.b32.xlu0 %v1877, 64
        %v1887 = vpop.permute.xlu0 %1886
        %1888 = vrot.lane.b32.xlu0 %v1878, 64
        %v1889 = vpop.permute.xlu0 %1888
        %1890 = vrot.lane.b32.xlu0 %v1879, 64
        %v1891 = vpop.permute.xlu0 %1890
        %1896 = vst.msk [vmem:[#allocation2 + $0x8] sm:$0xff] %vm1782, %v1885
        %1897 = vst.msk [vmem:[#allocation2 + $0x20] sm:$0xff] %vm1782, %v1887
        %1898 = vst.msk [vmem:[#allocation2 + $0x38] sm:$0xff] %vm1782, %v1889
        %1899 = vst.msk [vmem:[#allocation2 + $0x50] sm:$0xff] %vm1782, %v1891
        %v1900 = vld [vmem:[%s1422 + $0x1] sm:$0xff]
        %v1901 = vld [vmem:[%s1422 + $0x11] sm:$0xff]
        %v1902 = vld [vmem:[%s1422 + $0x21] sm:$0xff]
        %v1903 = vld [vmem:[%s1422 + $0x31] sm:$0xff]
        %v1904 = vld [vmem:[%s1422 + $0x41] sm:$0xff]
        %v1905 = vld [vmem:[%s1422 + $0x51] sm:$0xff]
        %v1906 = vld [vmem:[%s1422 + $0x61] sm:$0xff]
        %v1907 = vld [vmem:[%s1422 + $0x71] sm:$0xff]
        %v1908 = vpack.c.bf16 %v1901, %v1900
        %v1909 = vpack.c.bf16 %v1903, %v1902
        %v1910 = vpack.c.bf16 %v1905, %v1904
        %v1911 = vpack.c.bf16 %v1907, %v1906
        %1916 = vrot.lane.b32.xlu0 %v1908, 96
        %v1917 = vpop.permute.xlu0 %1916
        %1918 = vrot.lane.b32.xlu0 %v1909, 96
        %v1919 = vpop.permute.xlu0 %1918
        %1920 = vrot.lane.b32.xlu0 %v1910, 96
        %v1921 = vpop.permute.xlu0 %1920
        %1922 = vrot.lane.b32.xlu0 %v1911, 96
        %v1923 = vpop.permute.xlu0 %1922
        %1928 = vst.msk [vmem:[#allocation2 + $0x8] sm:$0xff] %vm1815, %v1917
        %1929 = vst.msk [vmem:[#allocation2 + $0x20] sm:$0xff] %vm1815, %v1919
        %1930 = vst.msk [vmem:[#allocation2 + $0x38] sm:$0xff] %vm1815, %v1921
        %1931 = vst.msk [vmem:[#allocation2 + $0x50] sm:$0xff] %vm1815, %v1923
        %v1932 = vld [vmem:[%s1422 + $0x2] sm:$0xff]
        %v1933 = vld [vmem:[%s1422 + $0x12] sm:$0xff]
        %v1934 = vld [vmem:[%s1422 + $0x22] sm:$0xff]
        %v1935 = vld [vmem:[%s1422 + $0x32] sm:$0xff]
        %v1936 = vld [vmem:[%s1422 + $0x42] sm:$0xff]
        %v1937 = vld [vmem:[%s1422 + $0x52] sm:$0xff]
        %v1938 = vld [vmem:[%s1422 + $0x62] sm:$0xff]
        %v1939 = vld [vmem:[%s1422 + $0x72] sm:$0xff]
        %v1940 = vpack.c.bf16 %v1933, %v1932
        %v1941 = vpack.c.bf16 %v1935, %v1934
        %v1942 = vpack.c.bf16 %v1937, %v1936
        %v1943 = vpack.c.bf16 %v1939, %v1938
        %1944 = vst.msk [vmem:[#allocation2 + $0x10] sm:$0xff] %vm1209, %v1940
        %1945 = vst.msk [vmem:[#allocation2 + $0x28] sm:$0xff] %vm1209, %v1941
        %1946 = vst.msk [vmem:[#allocation2 + $0x40] sm:$0xff] %vm1209, %v1942
        %1947 = vst.msk [vmem:[#allocation2 + $0x58] sm:$0xff] %vm1209, %v1943
        %v1948 = vld [vmem:[#allocation2] sm:$0xff]
        %v1949 = vld [vmem:[#allocation2 + $0x8] sm:$0xff]
        %v1950 = vld [vmem:[#allocation2 + $0x10] sm:$0xff]
        %v1951 = vld [vmem:[#allocation2 + $0x18] sm:$0xff]
        %v1952 = vld [vmem:[#allocation2 + $0x20] sm:$0xff]
        %v1953 = vld [vmem:[#allocation2 + $0x28] sm:$0xff]
        %v1954 = vld [vmem:[#allocation2 + $0x30] sm:$0xff]
        %v1955 = vld [vmem:[#allocation2 + $0x38] sm:$0xff]
        %v1956 = vld [vmem:[#allocation2 + $0x40] sm:$0xff]
        %v1957 = vld [vmem:[#allocation2 + $0x48] sm:$0xff]
        %v1958 = vld [vmem:[#allocation2 + $0x50] sm:$0xff]
        %v1959 = vld [vmem:[#allocation2 + $0x58] sm:$0xff]
        %v1960 = vld [vmem:[%s5] sm:$0xf]
        %v1961 = vld [vmem:[%s5 + $0x4] sm:$0xf]
        %v1962 = vld [vmem:[%s5 + $0x8] sm:$0xf]
        %v1963 = vld [vmem:[%s5 + $0xc] sm:$0xf]
        %v1964 = vld [vmem:[%s5 + $0x10] sm:$0xf]
        %v1965 = vld [vmem:[%s5 + $0x14] sm:$0xf]
        %v1966 = vld [vmem:[%s5 + $0x18] sm:$0xf]
        %v1967 = vld [vmem:[%s5 + $0x1c] sm:$0xf]
        %v1968 = vld [vmem:[%s5 + $0x20] sm:$0xf]
        %v1969 = vld [vmem:[%s5 + $0x24] sm:$0xf]
        %v1970 = vld [vmem:[%s5 + $0x28] sm:$0xf]
        %v1971 = vld [vmem:[%s5 + $0x2c] sm:$0xf]
        %v1972 = vld [vmem:[%s5 + $0x30] sm:$0xf]
        %v1973 = vld [vmem:[%s5 + $0x34] sm:$0xf]
        %v1974 = vld [vmem:[%s5 + $0x38] sm:$0xf]
        %v1975 = vld [vmem:[%s5 + $0x3c] sm:$0xf]
        %v1976 = vld [vmem:[%s5 + $0x40] sm:$0xf]
        %v1977 = vld [vmem:[%s5 + $0x44] sm:$0xf]
        %v1978 = vld [vmem:[%s5 + $0x48] sm:$0xf]
        %v1979 = vld [vmem:[%s5 + $0x4c] sm:$0xf]
        %v1980 = vld [vmem:[%s5 + $0x50] sm:$0xf]
        %v1981 = vld [vmem:[%s5 + $0x54] sm:$0xf]
        %v1982 = vld [vmem:[%s5 + $0x58] sm:$0xf]
        %v1983 = vld [vmem:[%s5 + $0x5c] sm:$0xf]
        %v1984 = vld [vmem:[%s5 + $0x60] sm:$0xf]
        %v1985 = vld [vmem:[%s5 + $0x64] sm:$0xf]
        %v1986 = vld [vmem:[%s5 + $0x68] sm:$0xf]
        %v1987 = vld [vmem:[%s5 + $0x6c] sm:$0xf]
        %v1988 = vld [vmem:[%s5 + $0x70] sm:$0xf]
        %v1989 = vld [vmem:[%s5 + $0x74] sm:$0xf]
        %v1990 = vld [vmem:[%s5 + $0x78] sm:$0xf]
        %v1991 = vld [vmem:[%s5 + $0x7c] sm:$0xf]
        %v1992 = vld [vmem:[%s5 + $0x80] sm:$0xf]
        %v1993 = vld [vmem:[%s5 + $0x84] sm:$0xf]
        %v1994 = vld [vmem:[%s5 + $0x88] sm:$0xf]
        %v1995 = vld [vmem:[%s5 + $0x8c] sm:$0xf]
        %v1996 = vld [vmem:[%s6] sm:$0x1]
        %v1998 = vlaneseq
        %v1999 = vshrl.u32 %v1998, 7
        %v2000 = vsub.s32 0, %v1999
        %v2001 = vrot.slane %v1996, %v2000
        %v2039 = vunpack.c.l.b16 %v1960
        %v2040 = vunpack.c.l.b16 %v1961
        %v2041 = vunpack.c.l.b16 %v1962
        %v2042 = vunpack.c.l.b16 %v1963
        %v2043 = vunpack.c.l.b16 %v1964
        %v2044 = vunpack.c.l.b16 %v1965
        %v2045 = vunpack.c.l.b16 %v1966
        %v2046 = vunpack.c.l.b16 %v1967
        %v2047 = vunpack.c.l.b16 %v1968
        %v2048 = vunpack.c.l.b16 %v1969
        %v2049 = vunpack.c.l.b16 %v1970
        %v2050 = vunpack.c.l.b16 %v1971
        %v2051 = vunpack.c.l.b16 %v1972
        %v2052 = vunpack.c.l.b16 %v1973
        %v2053 = vunpack.c.l.b16 %v1974
        %v2054 = vunpack.c.l.b16 %v1975
        %v2055 = vunpack.c.l.b16 %v1976
        %v2056 = vunpack.c.l.b16 %v1977
        %v2057 = vunpack.c.l.b16 %v1978
        %v2058 = vunpack.c.l.b16 %v1979
        %v2059 = vunpack.c.l.b16 %v1980
        %v2060 = vunpack.c.l.b16 %v1981
        %v2061 = vunpack.c.l.b16 %v1982
        %v2062 = vunpack.c.l.b16 %v1983
        %v2063 = vunpack.c.l.b16 %v1984
        %v2064 = vunpack.c.l.b16 %v1985
        %v2065 = vunpack.c.l.b16 %v1986
        %v2066 = vunpack.c.l.b16 %v1987
        %v2067 = vunpack.c.l.b16 %v1988
        %v2068 = vunpack.c.l.b16 %v1989
        %v2069 = vunpack.c.l.b16 %v1990
        %v2070 = vunpack.c.l.b16 %v1991
        %v2071 = vunpack.c.l.b16 %v1992
        %v2072 = vunpack.c.l.b16 %v1993
        %v2073 = vunpack.c.l.b16 %v1994
        %v2074 = vunpack.c.l.b16 %v1995
        %v2075 = vpack.c.b16 %v2040, %v2039
        %v2076 = vpack.c.b16 %v2042, %v2041
        %v2077 = vpack.c.b16 %v2044, %v2043
        %v2078 = vpack.c.b16 %v2046, %v2045
        %v2079 = vpack.c.b16 %v2048, %v2047
        %v2080 = vpack.c.b16 %v2050, %v2049
        %v2081 = vpack.c.b16 %v2052, %v2051
        %v2082 = vpack.c.b16 %v2054, %v2053
        %v2083 = vpack.c.b16 %v2056, %v2055
        %v2084 = vpack.c.b16 %v2058, %v2057
        %v2085 = vpack.c.b16 %v2060, %v2059
        %v2086 = vpack.c.b16 %v2062, %v2061
        %v2087 = vpack.c.b16 %v2064, %v2063
        %v2088 = vpack.c.b16 %v2066, %v2065
        %v2089 = vpack.c.b16 %v2068, %v2067
        %v2090 = vpack.c.b16 %v2070, %v2069
        %v2091 = vpack.c.b16 %v2072, %v2071
        %v2092 = vpack.c.b16 %v2074, %v2073
        %v2112 = vsel %vm1209, %v1950, 0
        %v2115 = vsel %vm1209, %v1953, 0
        %v2118 = vsel %vm1209, %v1956, 0
        %v2121 = vsel %vm1209, %v1959, 0
        %2123 = vmatprep.subr.bf16.mxu0 0
        %2124 = vmatpush1.bf16.msra.mxu0 %v2075
        %2125 = vmatprep.subr.bf16.mxu0 0
        %2126 = vmatpush1.bf16.msra.mxu0 %v2076
        %2127 = vmatprep.subr.bf16.mxu0 0
        %2128 = vmatpush1.bf16.msra.mxu0 %v2077
        %2129 = vmatprep.subr.bf16.mxu0 0
        %2130 = vmatpush1.bf16.msra.mxu0 %v2078
        %2131 = vmatprep.subr.bf16.mxu0 0
        %2132 = vmatpush1.bf16.msra.mxu0 %v2079
        %2133 = vmatprep.subr.bf16.mxu0 0
        %2134 = vmatpush1.bf16.msra.mxu0 %v2080
        %2135 = vmatprep.subr.bf16.mxu0 0
        %2136 = vmatpush1.bf16.msra.mxu0 %v2081
        %2137 = vmatprep.subr.bf16.mxu0 0
        %2138 = vmatpush1.bf16.msra.mxu0 %v2082
        %2139 = vmatprep.subr.bf16.mxu0 0
        %2140 = vmatpush1.bf16.msra.mxu0 %v2083
        %2141 = vmatprep.subr.bf16.mxu0 0
        %2142 = vmatpush1.bf16.msra.mxu0 %v2084
        %2143 = vmatprep.subr.bf16.mxu0 0
        %2144 = vmatpush1.bf16.msra.mxu0 %v2085
        %2145 = vmatprep.subr.bf16.mxu0 0
        %2146 = vmatpush1.bf16.msra.mxu0 %v2086
        %2147 = vmatprep.subr.bf16.mxu0 0
        %2148 = vmatpush1.bf16.msra.mxu0 %v2087
        %2149 = vmatprep.subr.bf16.mxu0 0
        %2150 = vmatpush1.bf16.msra.mxu0 %v2088
        %2151 = vmatprep.subr.bf16.mxu0 0
        %2152 = vmatpush1.bf16.msra.mxu0 %v2089
        %2153 = vmatprep.subr.bf16.mxu0 0
        %2154 = vmatpush1.bf16.msra.mxu0 %v2090
        %2155 = vmatprep.mubr.bf16.mxu0 %v1949
        %2156 = vmatmul.mubr.bf16.gmra.mrb[0].mxu0 %v1948
        %v2157 = vpop.f32.mrb[0].mxu0
        %v2158 = vadd.f32 %v2001, %v2157
        %v2159 = vpop.f32.mrb[0].mxu0
        %v2160 = vpop.f32.mrb[0].mxu0
        %v2161 = vadd.f32 %v2001, %v2160
        %v2162 = vpop.f32.mrb[0].mxu0
        %2163 = vmatprep.mubr.bf16.mxu0 %v1952
        %2164 = vmatmul.mubr.bf16.gmra.mrb[0].mxu0 %v1951
        %v2165 = vpop.f32.mrb[0].mxu0
        %v2166 = vadd.f32 %v2001, %v2165
        %v2167 = vpop.f32.mrb[0].mxu0
        %v2168 = vpop.f32.mrb[0].mxu0
        %v2169 = vadd.f32 %v2001, %v2168
        %v2170 = vpop.f32.mrb[0].mxu0
        %2171 = vmatprep.mubr.bf16.mxu0 %v1955
        %2172 = vmatmul.mubr.bf16.gmra.mrb[0].mxu0 %v1954
        %v2173 = vpop.f32.mrb[0].mxu0
        %v2174 = vadd.f32 %v2001, %v2173
        %v2175 = vpop.f32.mrb[0].mxu0
        %v2176 = vpop.f32.mrb[0].mxu0
        %v2177 = vadd.f32 %v2001, %v2176
        %v2178 = vpop.f32.mrb[0].mxu0
        %2179 = vmatprep.mubr.bf16.mxu0 %v1958
        %2180 = vmatmul.mubr.bf16.gmra.mrb[0].mxu0 %v1957
        %v2181 = vpop.f32.mrb[0].mxu0
        %v2182 = vadd.f32 %v2001, %v2181
        %v2183 = vpop.f32.mrb[0].mxu0
        %v2184 = vpop.f32.mrb[0].mxu0
        %v2185 = vadd.f32 %v2001, %v2184
        %v2186 = vpop.f32.mrb[0].mxu0
        %2187 = vdwg.mxu0
        %2188 = vmatprep.subr.bf16.mxu0 0
        %2189 = vmatpush1.bf16.msra.mxu0 %v2091
        %2190 = vmatprep.subr.bf16.mxu0 0
        %2191 = vmatpush1.bf16.msra.mxu0 %v2092
        %2192 = vmatprep.subr.bf16.mxu0 0
        %2193 = vmatpush1.bf16.msra.mxu0 0
        %2194 = vmatprep.subr.bf16.mxu0 0
        %2195 = vmatpush1.bf16.msra.mxu0 0
        %2196 = vmatprep.subr.bf16.mxu0 0
        %2197 = vmatpush1.bf16.msra.mxu0 0
        %2198 = vmatprep.subr.bf16.mxu0 0
        %2199 = vmatpush1.bf16.msra.mxu0 0
        %2200 = vmatprep.subr.bf16.mxu0 0
        %2201 = vmatpush1.bf16.msra.mxu0 0
        %2202 = vmatprep.subr.bf16.mxu0 0
        %2203 = vmatpush1.bf16.msra.mxu0 0
        %2204 = vmatprep.subr.bf16.mxu0 0
        %2205 = vmatpush1.bf16.msra.mxu0 0
        %2206 = vmatprep.subr.bf16.mxu0 0
        %2207 = vmatpush1.bf16.msra.mxu0 0
        %2208 = vmatprep.subr.bf16.mxu0 0
        %2209 = vmatpush1.bf16.msra.mxu0 0
        %2210 = vmatprep.subr.bf16.mxu0 0
        %2211 = vmatpush1.bf16.msra.mxu0 0
        %2212 = vmatprep.subr.bf16.mxu0 0
        %2213 = vmatpush1.bf16.msra.mxu0 0
        %2214 = vmatprep.subr.bf16.mxu0 0
        %2215 = vmatpush1.bf16.msra.mxu0 0
        %2216 = vmatprep.subr.bf16.mxu0 0
        %2217 = vmatpush1.bf16.msra.mxu0 0
        %2218 = vmatprep.subr.bf16.mxu0 0
        %2219 = vmatpush1.bf16.msra.mxu0 0
        %2220 = vmatprep.mubr.bf16.mxu0 0
        %2221 = vmatmul.mubr.bf16.gmra.mrb[0].mxu0 %v2112
        %v2222 = vpop.f32.mrb[0].mxu0
        %v2223 = vadd.f32 %v2158, %v2222
        %v2224 = vpop.f32.mrb[0].mxu0
        %v2225 = vpop.f32.mrb[0].mxu0
        %v2226 = vadd.f32 %v2161, %v2225
        %v2227 = vpop.f32.mrb[0].mxu0
        %2228 = vmatprep.mubr.bf16.mxu0 0
        %2229 = vmatmul.mubr.bf16.gmra.mrb[0].mxu0 %v2115
        %v2230 = vpop.f32.mrb[0].mxu0
        %v2231 = vadd.f32 %v2166, %v2230
        %v2232 = vpop.f32.mrb[0].mxu0
        %v2233 = vpop.f32.mrb[0].mxu0
        %v2234 = vadd.f32 %v2169, %v2233
        %v2235 = vpop.f32.mrb[0].mxu0
        %2236 = vmatprep.mubr.bf16.mxu0 0
        %2237 = vmatmul.mubr.bf16.gmra.mrb[0].mxu0 %v2118
        %v2238 = vpop.f32.mrb[0].mxu0
        %v2239 = vadd.f32 %v2174, %v2238
        %v2240 = vpop.f32.mrb[0].mxu0
        %v2241 = vpop.f32.mrb[0].mxu0
        %v2242 = vadd.f32 %v2177, %v2241
        %v2243 = vpop.f32.mrb[0].mxu0
        %2244 = vmatprep.mubr.bf16.mxu0 0
        %2245 = vmatmul.mubr.bf16.gmra.mrb[0].mxu0 %v2121
        %v2246 = vpop.f32.mrb[0].mxu0
        %v2247 = vadd.f32 %v2182, %v2246
        %v2248 = vpop.f32.mrb[0].mxu0
        %v2249 = vpop.f32.mrb[0].mxu0
        %v2250 = vadd.f32 %v2185, %v2249
        %v2251 = vpop.f32.mrb[0].mxu0
        %2252 = vdwg.mxu0
        %v2253 = vmax.f32 %v2223, 0.0
        %v2254 = vmax.f32 %v2226, 0.0
        %v2255 = vmax.f32 %v2231, 0.0
        %v2256 = vmax.f32 %v2234, 0.0
        %v2257 = vmax.f32 %v2239, 0.0
        %v2258 = vmax.f32 %v2242, 0.0
        %v2259 = vmax.f32 %v2247, 0.0
        %v2260 = vmax.f32 %v2250, 0.0
        %v2261 = vpack.c.bf16 %v2254, %v2253
        %v2262 = vpack.c.bf16 %v2256, %v2255
        %v2263 = vpack.c.bf16 %v2258, %v2257
        %v2264 = vpack.c.bf16 %v2260, %v2259
        %v2265 = vld [vmem:[%s7] sm:$0xf]
        %v2266 = vld [vmem:[%s7 + $0x4] sm:$0xf]
        %v2267 = vld [vmem:[%s7 + $0x8] sm:$0xf]
        %v2268 = vld [vmem:[%s7 + $0xc] sm:$0xf]
        %v2269 = vld [vmem:[%s7 + $0x10] sm:$0xf]
        %v2270 = vld [vmem:[%s7 + $0x14] sm:$0xf]
        %v2271 = vld [vmem:[%s7 + $0x18] sm:$0xf]
        %v2272 = vld [vmem:[%s7 + $0x1c] sm:$0xf]
        %v2273 = vld [vmem:[%s8] sm:$0x1]
        %v2275 = vlaneseq
        %v2276 = vshrl.u32 %v2275, 7
        %v2277 = vsub.s32 0, %v2276
        %v2278 = vrot.slane %v2273, %v2277
        %v2288 = vunpack.c.l.b16 %v2265
        %v2289 = vunpack.c.l.b16 %v2266
        %v2290 = vunpack.c.l.b16 %v2267
        %v2291 = vunpack.c.l.b16 %v2268
        %v2292 = vunpack.c.l.b16 %v2269
        %v2293 = vunpack.c.l.b16 %v2270
        %v2294 = vunpack.c.l.b16 %v2271
        %v2295 = vunpack.c.l.b16 %v2272
        %v2296 = vpack.c.b16 %v2289, %v2288
        %v2297 = vpack.c.b16 %v2291, %v2290
        %v2298 = vpack.c.b16 %v2293, %v2292
        %v2299 = vpack.c.b16 %v2295, %v2294
        %vm2304 = vcmask 523264
        %v2306 = vsel %vm2304, %v2261, 0
        %v2309 = vsel %vm2304, %v2262, 0
        %v2312 = vsel %vm2304, %v2263, 0
        %v2315 = vsel %vm2304, %v2264, 0
        %2317 = vmatprep.subr.bf16.mxu0 0
        %2318 = vmatpush1.bf16.msra.mxu0 %v2296
        %2319 = vmatprep.subr.bf16.mxu0 0
        %2320 = vmatpush1.bf16.msra.mxu0 %v2297
        %2321 = vmatprep.subr.bf16.mxu0 0
        %2322 = vmatpush1.bf16.msra.mxu0 %v2298
        %2323 = vmatprep.subr.bf16.mxu0 0
        %2324 = vmatpush1.bf16.msra.mxu0 %v2299
        %2325 = vmatprep.subr.bf16.mxu0 0
        %2326 = vmatpush1.bf16.msra.mxu0 0
        %2327 = vmatprep.subr.bf16.mxu0 0
        %2328 = vmatpush1.bf16.msra.mxu0 0
        %2329 = vmatprep.subr.bf16.mxu0 0
        %2330 = vmatpush1.bf16.msra.mxu0 0
        %2331 = vmatprep.subr.bf16.mxu0 0
        %2332 = vmatpush1.bf16.msra.mxu0 0
        %2333 = vmatprep.subr.bf16.mxu0 0
        %2334 = vmatpush1.bf16.msra.mxu0 0
        %2335 = vmatprep.subr.bf16.mxu0 0
        %2336 = vmatpush1.bf16.msra.mxu0 0
        %2337 = vmatprep.subr.bf16.mxu0 0
        %2338 = vmatpush1.bf16.msra.mxu0 0
        %2339 = vmatprep.subr.bf16.mxu0 0
        %2340 = vmatpush1.bf16.msra.mxu0 0
        %2341 = vmatprep.subr.bf16.mxu0 0
        %2342 = vmatpush1.bf16.msra.mxu0 0
        %2343 = vmatprep.subr.bf16.mxu0 0
        %2344 = vmatpush1.bf16.msra.mxu0 0
        %2345 = vmatprep.subr.bf16.mxu0 0
        %2346 = vmatpush1.bf16.msra.mxu0 0
        %2347 = vmatprep.subr.bf16.mxu0 0
        %2348 = vmatpush1.bf16.msra.mxu0 0
        %2349 = vmatprep.mubr.bf16.mxu0 0
        %2350 = vmatmul.mubr.bf16.gmra.mrb[0].mxu0 %v2306
        %v2351 = vpop.f32.mrb[0].mxu0
        %v2352 = vadd.f32 %v2278, %v2351
        %v2353 = vpop.f32.mrb[0].mxu0
        %v2354 = vpop.f32.mrb[0].mxu0
        %v2355 = vadd.f32 %v2278, %v2354
        %v2356 = vpop.f32.mrb[0].mxu0
        %2357 = vmatprep.mubr.bf16.mxu0 0
        %2358 = vmatmul.mubr.bf16.gmra.mrb[0].mxu0 %v2309
        %v2359 = vpop.f32.mrb[0].mxu0
        %v2360 = vadd.f32 %v2278, %v2359
        %v2361 = vpop.f32.mrb[0].mxu0
        %v2362 = vpop.f32.mrb[0].mxu0
        %v2363 = vadd.f32 %v2278, %v2362
        %v2364 = vpop.f32.mrb[0].mxu0
        %2365 = vmatprep.mubr.bf16.mxu0 0
        %2366 = vmatmul.mubr.bf16.gmra.mrb[0].mxu0 %v2312
        %v2367 = vpop.f32.mrb[0].mxu0
        %v2368 = vadd.f32 %v2278, %v2367
        %v2369 = vpop.f32.mrb[0].mxu0
        %v2370 = vpop.f32.mrb[0].mxu0
        %v2371 = vadd.f32 %v2278, %v2370
        %v2372 = vpop.f32.mrb[0].mxu0
        %2373 = vmatprep.mubr.bf16.mxu0 0
        %2374 = vmatmul.mubr.bf16.gmra.mrb[0].mxu0 %v2315
        %v2375 = vpop.f32.mrb[0].mxu0
        %v2376 = vadd.f32 %v2278, %v2375
        %v2377 = vpop.f32.mrb[0].mxu0
        %v2378 = vpop.f32.mrb[0].mxu0
        %v2379 = vadd.f32 %v2278, %v2378
        %v2380 = vpop.f32.mrb[0].mxu0
        %2381 = vdwg.mxu0
        %v2382 = vmax.f32 %v2352, 0.0
        %v2383 = vmax.f32 %v2355, 0.0
        %v2384 = vmax.f32 %v2360, 0.0
        %v2385 = vmax.f32 %v2363, 0.0
        %v2386 = vmax.f32 %v2368, 0.0
        %v2387 = vmax.f32 %v2371, 0.0
        %v2388 = vmax.f32 %v2376, 0.0
        %v2389 = vmax.f32 %v2379, 0.0
        %v2390 = vadd.f32 %v2382, %v2383
        %v2391 = vadd.f32 %v2390, %v2384
        %v2392 = vadd.f32 %v2391, %v2385
        %v2393 = vadd.f32 %v2392, %v2386
        %v2394 = vadd.f32 %v2393, %v2387
        %v2395 = vadd.f32 %v2394, %v2388
        %v2396 = vadd.f32 %v2395, %v2389
        %v2397 = vrot.slane %v2396, 4
        %v2398 = vadd.f32 %v2396, %v2397
        %v2399 = vrot.slane %v2398, 2
        %v2400 = vadd.f32 %v2398, %v2399
        %v2401 = vrot.slane %v2400, 1
        %v2402 = vadd.f32 %v2400, %v2401
        %v2403 = vrcp.pop 64.0
        %v2404 = vmul.f32 %v2402, %v2403
        %2405 = vst [vmem:[%s324] sm:$0x1] %v2404
        %s2406 = sand.u32 %s225, 1
        %s2407 = scalar_lea.sflag [#allocation5], %s2406
        %s2408 = sand.u32 %s225, 1
        %s2409 = scalar_lea.vmem [#allocation4], %s2408
        // Predicated region
        $region57: #{a_call__.1} parent=55 // pred_check
          %p2410 = pneg %p235
        $region58: #{a_call__.1} parent=55 // pred_check_branch
          %2412 = sbr.rel (%p2410) target = $region60
        $region59: #{a_call__.1} parent=55 // pred_region
          %s2414 = ssub.s32 16, 16
          %2415 = vsyncadd %s2407, %s2414
          %s2416 = smul.addr %s23, 16
          %s2417 = scalar_lea.hbm %s9, %s2416
          %s2419 = sshll.u32 %s2409, 4
          %s2420 = int_to_ptr.vmem [resolvable:$true] %s2419
          %2422 = dma.vmem_to_hbm [thread:$0]  %s2420, 16, %s2417, %s2407
        $region60: #{a_call__.1} parent=55 // pred_fallthru
          _
      $region56: #{a_call__.1} parent=5 // pred_fallthru
        _
      %p2423 = scmp.le.s32.totalorder 2, %s18
      // Predicated region
      $region61: #{a_call__.1} parent=5 // pred_check
        %p2424 = pneg %p2423
      $region62: #{a_call__.1} parent=5 // pred_check_branch
        %2426 = sbr.rel (%p2424) target = $region64
      $region63: #{a_call__.1} parent=5 // pred_region
        %s2427 = ssub.s32 %s18, 2
        // Predicated region
        $region65: #{a_call__.1} parent=63 // pred_check
          %p2428 = pneg %p241
        $region66: #{a_call__.1} parent=63 // pred_check_branch
          %2430 = sbr.rel (%p2428) target = $region68
        $region67: #{a_call__.1} parent=63 // pred_region
          %s2431 = sand.u32 %s226, 1
          %s2432 = scalar_lea.sflag [#allocation5], %s2431
          %s2433 = sand.u32 %s226, 1
          %s2434 = scalar_lea.vmem [#allocation4], %s2433
          %2435 = dma.done %s2432, 16
        $region68: #{a_call__.1} parent=63 // pred_fallthru
          _
      $region64: #{a_call__.1} parent=5 // pred_fallthru
        _
    $region6: #{a_call__.1} parent=1 // loop_footer
      %s22 = sadd.s32 1, %s18
    $region7: #{a_call__.1} parent=1 // loop_footer_branch
      %17 = sbr.rel target = $region3
    $region8: #{a_call__.1} parent=1 // loop_exit
      _
    %2436 = vsyncpa [#allocation5], 1
    %s2437 = scalar_lea.sflag [#allocation5], 1
    %2438 = vsyncpa %s2437, 1

</llo_original>
